<compile_context>
chip_gen: v7x
topology: tpu7x:2x2x1
jax: 0.10.0
libtpu: 0.0.40
codegen_flags: <defaults>
</compile_context>

<pallas_src>
import functools

import jax
import jax.numpy as jnp
import numpy as np
from jax import lax
from jax.experimental import pallas as pl
from jax.experimental.pallas import tpu as pltpu


def _cdiv(a, b):
    return -(-a // b)


_VMEM_LIMIT = None


def _vmem_limit_bytes():
    """Generation-aware scoped-VMEM budget (~3/4 of physical VMEM)."""
    global _VMEM_LIMIT
    if _VMEM_LIMIT is None:
        try:
            phys = int(pltpu.get_tpu_info().vmem_capacity_bytes)
        except Exception:
            phys = 64 * 1024 * 1024            # assume smallest (v7x per-core)
        _VMEM_LIMIT = min(112 << 20, max(32 << 20, (phys * 3) // 4))
    return _VMEM_LIMIT


def _pick_row_tile(ho, cap):
    """Largest 'nice' row tile <= cap.  Prefer an exact divisor of ho when a
    reasonably large one exists; otherwise take cap and let the caller pad."""
    cap = max(1, min(ho, cap))
    div = 1
    for d in range(cap, 0, -1):
        if ho % d == 0:
            div = d
            break
    return div if 2 * div >= cap else cap


# ------------------------------ use_conv=True ------------------------------

def _conv3x3_s2_kernel(pee_ref, peo_ref, poe_ref, poo_ref, w_ref, b_ref, o_ref):
    # p??_ref: space-to-depth phase planes of the zero-padded NHWC image,
    #          indexed [row parity][col parity]; each stays VMEM-resident
    #          across the row-tile grid axis (block index constant in j).
    #   pee: (Ho_pad+1, Wo+1, Cin)   peo: (Ho_pad+1, Wo, Cin)
    #   poe: (Ho_pad,   Wo+1, Cin)   poo: (Ho_pad,   Wo, Cin)
    # w_ref: (3, 3, Cin, Cout)   b_ref: (1, Cout)   o_ref: (th, Wo, Cout)
    th, wo, cout = o_ref.shape
    cin = pee_ref.shape[-1]
    phase = ((pee_ref, peo_ref), (poe_ref, poo_ref))
    r0 = pl.multiple_of(pl.program_id(1) * th, th)

    acc = jnp.zeros((th * wo, cout), dtype=jnp.float32)
    for kh in range(3):
        for kw in range(3):
            ref = phase[kh % 2][kw % 2]
            # Contiguous (unit-stride) tap window: output rows [r0, r0+th),
            # all Wo output columns, for kernel tap (kh, kw).
            tap = ref[pl.ds(r0 + kh // 2, th), pl.ds(kw // 2, wo), :]
            acc = acc + jnp.dot(tap.reshape(th * wo, cin), w_ref[kh, kw],
                                preferred_element_type=jnp.float32)
    out = acc + b_ref[...].astype(jnp.float32)
    o_ref[...] = out.reshape(th, wo, cout).astype(o_ref.dtype)


def downsample_conv(x_nchw, weight_oihw, bias, *, row_tile=None,
                    compute_dtype=jnp.bfloat16):
    """Downsample.forward with use_conv=True (Conv2d k=3, stride=2, pad=1).

    Accepts / returns PyTorch-style NCHW.  MXU inputs default to bfloat16
    (f32 accumulation); pass compute_dtype=None/jnp.float32 for exact f32.
    """
    N, Cin, H, W = x_nchw.shape
    Cout = weight_oihw.shape[0]
    Ho = (H - 1) // 2 + 1
    Wo = (W - 1) // 2 + 1

    # Row tile: f32 accumulator (th*Wo, Cout) capped at ~256 KiB (vreg file
    # size) and ~512 output pixels of M per tile.
    if row_tile is None:
        cap = max(1, min(max(1, (256 * 1024) // max(1, Wo * Cout * 4)),
                         max(1, 512 // max(1, Wo))))
        if N == 1:                       # keep >=2 row tiles for v7x megacore
            cap = min(cap, max(1, _cdiv(Ho, 2)))
        th = _pick_row_tile(Ho, cap)
    else:
        th = max(1, min(int(row_tile), Ho))
    n_row_tiles = _cdiv(Ho, th)
    Ho_pad = n_row_tiles * th

    # Cast first (halves the bytes the transpose/pad/phase-split pass moves),
    # then NHWC transpose, zero pad and space-to-depth phase split.  XLA fuses
    # these into one pass over the activations.
    x = x_nchw if compute_dtype is None else x_nchw.astype(compute_dtype)
    x = jnp.transpose(x, (0, 2, 3, 1))                        # (N, H, W, Cin)
    xp = jnp.pad(x, ((0, 0), (1, 2 * Ho_pad - H), (1, 2 * Wo - W), (0, 0)))
    p_ee = xp[:, 0::2, 0::2, :]          # (N, Ho_pad+1, Wo+1, Cin)
    p_eo = xp[:, 0::2, 1::2, :]          # (N, Ho_pad+1, Wo,   Cin)
    p_oe = xp[:, 1::2, 0::2, :]          # (N, Ho_pad,   Wo+1, Cin)
    p_oo = xp[:, 1::2, 1::2, :]          # (N, Ho_pad,   Wo,   Cin)

    w = weight_oihw if compute_dtype is None else weight_oihw.astype(compute_dtype)
    w = jnp.transpose(w, (2, 3, 1, 0))                        # (3, 3, Cin, Cout)
    b = bias.astype(jnp.float32).reshape(1, Cout)

    def phase_spec(rows, cols):
        # Whole phase plane per batch element; block index constant across the
        # row-tile axis -> stays VMEM resident (no re-DMA) between row tiles.
        return pl.BlockSpec((None, rows, cols, Cin), lambda n, j: (n, 0, 0, 0))

    out = pl.pallas_call(
        _conv3x3_s2_kernel,
        out_shape=jax.ShapeDtypeStruct((N, Ho_pad, Wo, Cout), x_nchw.dtype),
        grid=(N, n_row_tiles),
        in_specs=[
            phase_spec(Ho_pad + 1, Wo + 1),
            phase_spec(Ho_pad + 1, Wo),
            phase_spec(Ho_pad, Wo + 1),
            phase_spec(Ho_pad, Wo),
            pl.BlockSpec((3, 3, Cin, Cout), lambda n, j: (0, 0, 0, 0)),
            pl.BlockSpec((1, Cout), lambda n, j: (0, 0)),
        ],
        # NOTE: Cout < 128 at toy sizes -> masked stores; at real UNet widths
        # (Cout a multiple of 128) the output store path is lane-dense.
        out_specs=pl.BlockSpec((None, th, Wo, Cout), lambda n, j: (n, j, 0, 0)),
        compiler_params=pltpu.CompilerParams(
            dimension_semantics=("parallel", "parallel"),
            vmem_limit_bytes=_vmem_limit_bytes()),
    )(p_ee, p_eo, p_oe, p_oo, w, b)

    out = out[:, :Ho]                    # drop padded tail rows (no-op if none)
    return jnp.transpose(out, (0, 3, 1, 2))                   # back to NCHW


# ----------------------------- use_conv=False ------------------------------

def _avgpool2x2_kernel(xe_ref, xo_ref, o_ref):
    # xe_ref / xo_ref: (th, Wo, 2*C) even / odd input rows with the two
    # horizontal neighbours packed contiguously on the lane axis.
    th, wo, c = o_ref.shape
    s = (xe_ref[:, :, :c].astype(jnp.float32)
         + xe_ref[:, :, c:].astype(jnp.float32)
         + xo_ref[:, :, :c].astype(jnp.float32)
         + xo_ref[:, :, c:].astype(jnp.float32))
    o_ref[...] = (s * 0.25).astype(o_ref.dtype)


def downsample_avgpool(x_nchw, *, row_tile=None):
    """Downsample.forward with use_conv=False (AvgPool2d k=2, stride=2)."""
    N, C, H, W = x_nchw.shape
    Ho, Wo = H // 2, W // 2

    if row_tile is None:
        row_bytes = 4 * Wo * C * x_nchw.dtype.itemsize    # input bytes / out row
        cap = max(1, (8 << 20) // max(1, row_bytes))      # ~8 MiB per grid step
        if N == 1:
            cap = min(cap, max(1, _cdiv(Ho, 2)))
        th = _pick_row_tile(Ho, cap)
    else:
        th = max(1, min(int(row_tile), Ho))
    n_row_tiles = _cdiv(Ho, th)
    Ho_pad = n_row_tiles * th

    # One fused pass: floor-crop, NCHW->NHWC transpose, pack the horizontal
    # pair on the lane axis (free reshape), split even/odd rows.
    x = jnp.transpose(x_nchw[:, :, :2 * Ho, :2 * Wo], (0, 2, 3, 1))
    x = x.reshape(N, 2 * Ho, Wo, 2 * C)
    xe = x[:, 0::2]                                       # (N, Ho, Wo, 2*C)
    xo = x[:, 1::2]
    if Ho_pad > Ho:
        pad = ((0, 0), (0, Ho_pad - Ho), (0, 0), (0, 0))
        xe = jnp.pad(xe, pad)
        xo = jnp.pad(xo, pad)

    out = pl.pallas_call(
        _avgpool2x2_kernel,
        out_shape=jax.ShapeDtypeStruct((N, Ho_pad, Wo, C), x_nchw.dtype),
        grid=(N, n_row_tiles),
        in_specs=[pl.BlockSpec((None, th, Wo, 2 * C), lambda n, j: (n, j, 0, 0)),
                  pl.BlockSpec((None, th, Wo, 2 * C), lambda n, j: (n, j, 0, 0))],
        out_specs=pl.BlockSpec((None, th, Wo, C), lambda n, j: (n, j, 0, 0)),
        compiler_params=pltpu.CompilerParams(
            dimension_semantics=("parallel", "parallel"),
            vmem_limit_bytes=_vmem_limit_bytes()),
    )(xe, xo)

    out = out[:, :Ho]
    return jnp.transpose(out, (0, 3, 1, 2))                   # back to NCHW


if __name__ == "__main__":
    key = jax.random.PRNGKey(0)
    k1, k2, k3 = jax.random.split(key, 3)

    # PyTorch forward input: NCHW
    N, Cin, H, W = 2, 4, 16, 16
    Cout = 8
    x = jax.random.normal(k1, (N, Cin, H, W), dtype=jnp.float32)

    # Deterministic parameter init (shapes from nn.Conv2d(Cin, Cout, 3)).
    fan_in = Cin * 3 * 3
    bound = 1.0 / np.sqrt(fan_in)
    weight = jax.random.uniform(k2, (Cout, Cin, 3, 3), jnp.float32, -bound, bound)
    bias = jax.random.uniform(k3, (Cout,), jnp.float32, -bound, bound)

    def conv_ref(xx, ww, bb):
        y = lax.conv_general_dilated(
            xx, ww, window_strides=(2, 2), padding=((1, 1), (1, 1)),
            dimension_numbers=("NCHW", "OIHW", "NCHW"),
            preferred_element_type=jnp.float32)
        return y + bb[None, :, None, None].astype(jnp.float32)

    # --- use_conv=True, exact f32 compute ---
    conv_f32 = jax.jit(functools.partial(downsample_conv, compute_dtype=jnp.float32))
    y = jax.block_until_ready(conv_f32(x, weight, bias))
    y_ref = conv_ref(x, weight, bias)
    assert y.shape == (N, Cout, H // 2, W // 2)
    assert np.allclose(np.asarray(y), np.asarray(y_ref), atol=1e-4, rtol=1e-4)

    # --- use_conv=True, default bf16 MXU inputs (f32 accumulation) ---
    conv_bf16 = jax.jit(downsample_conv)
    y16 = jax.block_until_ready(conv_bf16(x, weight, bias))
    y16_ref = conv_ref(x.astype(jnp.bfloat16), weight.astype(jnp.bfloat16), bias)
    assert np.allclose(np.asarray(y16), np.asarray(y16_ref, dtype=np.float32),
                       atol=1e-2, rtol=1e-2)

    # --- use_conv=False path (requires out_channels == channels) ---
    pool_fn = jax.jit(downsample_avgpool)
    p = jax.block_until_ready(pool_fn(x))
    p_ref = x.reshape(N, Cin, H // 2, 2, W // 2, 2).mean(axis=(3, 5))
    assert p.shape == (N, Cin, H // 2, W // 2)
    assert np.allclose(np.asarray(p), np.asarray(p_ref), atol=1e-5, rtol=1e-5)

    # --- awkward shapes: odd spatial dims, N == 1, row tile that does not
    #     divide Ho (exercises the padded-tail path) ---
    xa = jax.random.normal(k3, (1, 3, 13, 15), dtype=jnp.float32)
    wa = jax.random.uniform(k1, (6, 3, 3, 3), jnp.float32, -0.2, 0.2)
    ba = jax.random.uniform(k2, (6,), jnp.float32, -0.2, 0.2)
    ya = jax.block_until_ready(
        downsample_conv(xa, wa, ba, row_tile=3, compute_dtype=jnp.float32))
    ya_ref = conv_ref(xa, wa, ba)
    assert ya.shape == ya_ref.shape
    assert np.allclose(np.asarray(ya), np.asarray(ya_ref), atol=1e-4, rtol=1e-4)

    xb = jax.random.normal(k2, (1, 5, 15, 13), dtype=jnp.float32)
    pb = jax.block_until_ready(downsample_avgpool(xb, row_tile=4))
    pb_ref = xb[:, :, :14, :12].reshape(1, 5, 7, 2, 6, 2).mean(axis=(3, 5))
    assert pb.shape == pb_ref.shape
    assert np.allclose(np.asarray(pb), np.asarray(pb_ref), atol=1e-5, rtol=1e-5)

    print("KERNEL_OK")
</pallas_src>

<mosaic_0001>
module attributes {stable_mosaic.version = 11 : i64} {
  func.func @_conv3x3_s2_kernel(%arg0: i32, %arg1: i32, %arg2: memref<1x9x9x4xf32, #tpu.memory_space<vmem>>, %arg3: memref<1x9x8x4xf32, #tpu.memory_space<vmem>>, %arg4: memref<1x8x9x4xf32, #tpu.memory_space<vmem>>, %arg5: memref<1x8x8x4xf32, #tpu.memory_space<vmem>>, %arg6: memref<3x3x4x8xf32, #tpu.memory_space<vmem>>, %arg7: memref<1x8xf32, #tpu.memory_space<vmem>>, %arg8: memref<1x8x8x8xf32, #tpu.memory_space<vmem>>) attributes {dimension_semantics = [#tpu.dimension_semantics<parallel>, #tpu.dimension_semantics<parallel>], iteration_bounds = array<i64: 2, 1>, scalar_prefetch = 0 : i64, scratch_operands = 0 : i64, tpu.core_type = #tpu.core_type<tc>, window_params = [{transform_indices = @transform_0, window_bounds = array<i64: 1, 9, 9, 4>}, {transform_indices = @transform_1, window_bounds = array<i64: 1, 9, 8, 4>}, {transform_indices = @transform_2, window_bounds = array<i64: 1, 8, 9, 4>}, {transform_indices = @transform_3, window_bounds = array<i64: 1, 8, 8, 4>}, {pipeline_mode = #tpu.pipeline_mode<synchronous>, transform_indices = @transform_4, window_bounds = array<i64: 3, 3, 4, 8>}, {pipeline_mode = #tpu.pipeline_mode<synchronous>, transform_indices = @transform_5, window_bounds = array<i64: 1, 8>}, {transform_indices = @transform_6, window_bounds = array<i64: 1, 8, 8, 8>}]} {
    %c8_i32 = arith.constant 8 : i32
    %0 = arith.muli %arg1, %c8_i32 : i32
    %1 = tpu.assume_multiple %0, 8 : i32
    %cst = arith.constant 0.000000e+00 : f32
    %2 = vector.broadcast %cst : f32 to vector<64x8xf32>
    %c0_i32 = arith.constant 0 : i32
    %3 = arith.addi %1, %c0_i32 : i32
    %c0 = arith.constant 0 : index
    %4 = arith.index_cast %3 : i32 to index
    %c0_0 = arith.constant 0 : index
    %c0_1 = arith.constant 0 : index
    %5 = vector.load %arg2[%c0, %4, %c0_0, %c0_1] : memref<1x9x9x4xf32, #tpu.memory_space<vmem>>, vector<1x8x8x4xf32>
    %6 = vector.shape_cast %5 : vector<1x8x8x4xf32> to vector<8x8x4xf32>
    %7 = vector.shape_cast %6 : vector<8x8x4xf32> to vector<64x4xf32>
    %c0_2 = arith.constant 0 : index
    %c0_3 = arith.constant 0 : index
    %c0_4 = arith.constant 0 : index
    %c0_5 = arith.constant 0 : index
    %8 = vector.load %arg6[%c0_2, %c0_3, %c0_4, %c0_5] : memref<3x3x4x8xf32, #tpu.memory_space<vmem>>, vector<1x1x4x8xf32>
    %9 = vector.shape_cast %8 : vector<1x1x4x8xf32> to vector<4x8xf32>
    %cst_6 = arith.constant dense<0.000000e+00> : vector<64x8xf32>
    %10 = tpu.matmul %7, %9, %cst_6 {dimension_numbers = #tpu.dot_dimension_numbers<[1], [0], [0], [1], [0, 0, 1, 1], [], []>} : vector<64x4xf32>, vector<4x8xf32>, vector<64x8xf32> -> vector<64x8xf32>
    %11 = arith.addf %2, %10 : vector<64x8xf32>
    %c0_i32_7 = arith.constant 0 : i32
    %12 = arith.addi %1, %c0_i32_7 : i32
    %c0_8 = arith.constant 0 : index
    %13 = arith.index_cast %12 : i32 to index
    %c0_9 = arith.constant 0 : index
    %c0_10 = arith.constant 0 : index
    %14 = vector.load %arg3[%c0_8, %13, %c0_9, %c0_10] : memref<1x9x8x4xf32, #tpu.memory_space<vmem>>, vector<1x8x8x4xf32>
    %15 = vector.shape_cast %14 : vector<1x8x8x4xf32> to vector<8x8x4xf32>
    %16 = vector.shape_cast %15 : vector<8x8x4xf32> to vector<64x4xf32>
    %c0_11 = arith.constant 0 : index
    %c1 = arith.constant 1 : index
    %c0_12 = arith.constant 0 : index
    %c0_13 = arith.constant 0 : index
    %17 = vector.load %arg6[%c0_11, %c1, %c0_12, %c0_13] : memref<3x3x4x8xf32, #tpu.memory_space<vmem>>, vector<1x1x4x8xf32>
    %18 = vector.shape_cast %17 : vector<1x1x4x8xf32> to vector<4x8xf32>
    %cst_14 = arith.constant dense<0.000000e+00> : vector<64x8xf32>
    %19 = tpu.matmul %16, %18, %cst_14 {dimension_numbers = #tpu.dot_dimension_numbers<[1], [0], [0], [1], [0, 0, 1, 1], [], []>} : vector<64x4xf32>, vector<4x8xf32>, vector<64x8xf32> -> vector<64x8xf32>
    %20 = arith.addf %11, %19 : vector<64x8xf32>
    %c0_i32_15 = arith.constant 0 : i32
    %21 = arith.addi %1, %c0_i32_15 : i32
    %c0_16 = arith.constant 0 : index
    %22 = arith.index_cast %21 : i32 to index
    %c1_17 = arith.constant 1 : index
    %c0_18 = arith.constant 0 : index
    %23 = vector.load %arg2[%c0_16, %22, %c1_17, %c0_18] : memref<1x9x9x4xf32, #tpu.memory_space<vmem>>, vector<1x8x8x4xf32>
    %24 = vector.shape_cast %23 : vector<1x8x8x4xf32> to vector<8x8x4xf32>
    %25 = vector.shape_cast %24 : vector<8x8x4xf32> to vector<64x4xf32>
    %c0_19 = arith.constant 0 : index
    %c2 = arith.constant 2 : index
    %c0_20 = arith.constant 0 : index
    %c0_21 = arith.constant 0 : index
    %26 = vector.load %arg6[%c0_19, %c2, %c0_20, %c0_21] : memref<3x3x4x8xf32, #tpu.memory_space<vmem>>, vector<1x1x4x8xf32>
    %27 = vector.shape_cast %26 : vector<1x1x4x8xf32> to vector<4x8xf32>
    %cst_22 = arith.constant dense<0.000000e+00> : vector<64x8xf32>
    %28 = tpu.matmul %25, %27, %cst_22 {dimension_numbers = #tpu.dot_dimension_numbers<[1], [0], [0], [1], [0, 0, 1, 1], [], []>} : vector<64x4xf32>, vector<4x8xf32>, vector<64x8xf32> -> vector<64x8xf32>
    %29 = arith.addf %20, %28 : vector<64x8xf32>
    %c0_i32_23 = arith.constant 0 : i32
    %30 = arith.addi %1, %c0_i32_23 : i32
    %c0_24 = arith.constant 0 : index
    %31 = arith.index_cast %30 : i32 to index
    %c0_25 = arith.constant 0 : index
    %c0_26 = arith.constant 0 : index
    %32 = vector.load %arg4[%c0_24, %31, %c0_25, %c0_26] : memref<1x8x9x4xf32, #tpu.memory_space<vmem>>, vector<1x8x8x4xf32>
    %33 = vector.shape_cast %32 : vector<1x8x8x4xf32> to vector<8x8x4xf32>
    %34 = vector.shape_cast %33 : vector<8x8x4xf32> to vector<64x4xf32>
    %c1_27 = arith.constant 1 : index
    %c0_28 = arith.constant 0 : index
    %c0_29 = arith.constant 0 : index
    %c0_30 = arith.constant 0 : index
    %35 = vector.load %arg6[%c1_27, %c0_28, %c0_29, %c0_30] : memref<3x3x4x8xf32, #tpu.memory_space<vmem>>, vector<1x1x4x8xf32>
    %36 = vector.shape_cast %35 : vector<1x1x4x8xf32> to vector<4x8xf32>
    %cst_31 = arith.constant dense<0.000000e+00> : vector<64x8xf32>
    %37 = tpu.matmul %34, %36, %cst_31 {dimension_numbers = #tpu.dot_dimension_numbers<[1], [0], [0], [1], [0, 0, 1, 1], [], []>} : vector<64x4xf32>, vector<4x8xf32>, vector<64x8xf32> -> vector<64x8xf32>
    %38 = arith.addf %29, %37 : vector<64x8xf32>
    %c0_i32_32 = arith.constant 0 : i32
    %39 = arith.addi %1, %c0_i32_32 : i32
    %c0_33 = arith.constant 0 : index
    %40 = arith.index_cast %39 : i32 to index
    %c0_34 = arith.constant 0 : index
    %c0_35 = arith.constant 0 : index
    %41 = vector.load %arg5[%c0_33, %40, %c0_34, %c0_35] : memref<1x8x8x4xf32, #tpu.memory_space<vmem>>, vector<1x8x8x4xf32>
    %42 = vector.shape_cast %41 : vector<1x8x8x4xf32> to vector<8x8x4xf32>
    %43 = vector.shape_cast %42 : vector<8x8x4xf32> to vector<64x4xf32>
    %c1_36 = arith.constant 1 : index
    %c1_37 = arith.constant 1 : index
    %c0_38 = arith.constant 0 : index
    %c0_39 = arith.constant 0 : index
    %44 = vector.load %arg6[%c1_36, %c1_37, %c0_38, %c0_39] : memref<3x3x4x8xf32, #tpu.memory_space<vmem>>, vector<1x1x4x8xf32>
    %45 = vector.shape_cast %44 : vector<1x1x4x8xf32> to vector<4x8xf32>
    %cst_40 = arith.constant dense<0.000000e+00> : vector<64x8xf32>
    %46 = tpu.matmul %43, %45, %cst_40 {dimension_numbers = #tpu.dot_dimension_numbers<[1], [0], [0], [1], [0, 0, 1, 1], [], []>} : vector<64x4xf32>, vector<4x8xf32>, vector<64x8xf32> -> vector<64x8xf32>
    %47 = arith.addf %38, %46 : vector<64x8xf32>
    %c0_i32_41 = arith.constant 0 : i32
    %48 = arith.addi %1, %c0_i32_41 : i32
    %c0_42 = arith.constant 0 : index
    %49 = arith.index_cast %48 : i32 to index
    %c1_43 = arith.constant 1 : index
    %c0_44 = arith.constant 0 : index
    %50 = vector.load %arg4[%c0_42, %49, %c1_43, %c0_44] : memref<1x8x9x4xf32, #tpu.memory_space<vmem>>, vector<1x8x8x4xf32>
    %51 = vector.shape_cast %50 : vector<1x8x8x4xf32> to vector<8x8x4xf32>
    %52 = vector.shape_cast %51 : vector<8x8x4xf32> to vector<64x4xf32>
    %c1_45 = arith.constant 1 : index
    %c2_46 = arith.constant 2 : index
    %c0_47 = arith.constant 0 : index
    %c0_48 = arith.constant 0 : index
    %53 = vector.load %arg6[%c1_45, %c2_46, %c0_47, %c0_48] : memref<3x3x4x8xf32, #tpu.memory_space<vmem>>, vector<1x1x4x8xf32>
    %54 = vector.shape_cast %53 : vector<1x1x4x8xf32> to vector<4x8xf32>
    %cst_49 = arith.constant dense<0.000000e+00> : vector<64x8xf32>
    %55 = tpu.matmul %52, %54, %cst_49 {dimension_numbers = #tpu.dot_dimension_numbers<[1], [0], [0], [1], [0, 0, 1, 1], [], []>} : vector<64x4xf32>, vector<4x8xf32>, vector<64x8xf32> -> vector<64x8xf32>
    %56 = arith.addf %47, %55 : vector<64x8xf32>
    %c1_i32 = arith.constant 1 : i32
    %57 = arith.addi %1, %c1_i32 : i32
    %c0_50 = arith.constant 0 : index
    %58 = arith.index_cast %57 : i32 to index
    %c0_51 = arith.constant 0 : index
    %c0_52 = arith.constant 0 : index
    %59 = vector.load %arg2[%c0_50, %58, %c0_51, %c0_52] : memref<1x9x9x4xf32, #tpu.memory_space<vmem>>, vector<1x8x8x4xf32>
    %60 = vector.shape_cast %59 : vector<1x8x8x4xf32> to vector<8x8x4xf32>
    %61 = vector.shape_cast %60 : vector<8x8x4xf32> to vector<64x4xf32>
    %c2_53 = arith.constant 2 : index
    %c0_54 = arith.constant 0 : index
    %c0_55 = arith.constant 0 : index
    %c0_56 = arith.constant 0 : index
    %62 = vector.load %arg6[%c2_53, %c0_54, %c0_55, %c0_56] : memref<3x3x4x8xf32, #tpu.memory_space<vmem>>, vector<1x1x4x8xf32>
    %63 = vector.shape_cast %62 : vector<1x1x4x8xf32> to vector<4x8xf32>
    %cst_57 = arith.constant dense<0.000000e+00> : vector<64x8xf32>
    %64 = tpu.matmul %61, %63, %cst_57 {dimension_numbers = #tpu.dot_dimension_numbers<[1], [0], [0], [1], [0, 0, 1, 1], [], []>} : vector<64x4xf32>, vector<4x8xf32>, vector<64x8xf32> -> vector<64x8xf32>
    %65 = arith.addf %56, %64 : vector<64x8xf32>
    %c1_i32_58 = arith.constant 1 : i32
    %66 = arith.addi %1, %c1_i32_58 : i32
    %c0_59 = arith.constant 0 : index
    %67 = arith.index_cast %66 : i32 to index
    %c0_60 = arith.constant 0 : index
    %c0_61 = arith.constant 0 : index
    %68 = vector.load %arg3[%c0_59, %67, %c0_60, %c0_61] : memref<1x9x8x4xf32, #tpu.memory_space<vmem>>, vector<1x8x8x4xf32>
    %69 = vector.shape_cast %68 : vector<1x8x8x4xf32> to vector<8x8x4xf32>
    %70 = vector.shape_cast %69 : vector<8x8x4xf32> to vector<64x4xf32>
    %c2_62 = arith.constant 2 : index
    %c1_63 = arith.constant 1 : index
    %c0_64 = arith.constant 0 : index
    %c0_65 = arith.constant 0 : index
    %71 = vector.load %arg6[%c2_62, %c1_63, %c0_64, %c0_65] : memref<3x3x4x8xf32, #tpu.memory_space<vmem>>, vector<1x1x4x8xf32>
    %72 = vector.shape_cast %71 : vector<1x1x4x8xf32> to vector<4x8xf32>
    %cst_66 = arith.constant dense<0.000000e+00> : vector<64x8xf32>
    %73 = tpu.matmul %70, %72, %cst_66 {dimension_numbers = #tpu.dot_dimension_numbers<[1], [0], [0], [1], [0, 0, 1, 1], [], []>} : vector<64x4xf32>, vector<4x8xf32>, vector<64x8xf32> -> vector<64x8xf32>
    %74 = arith.addf %65, %73 : vector<64x8xf32>
    %c1_i32_67 = arith.constant 1 : i32
    %75 = arith.addi %1, %c1_i32_67 : i32
    %c0_68 = arith.constant 0 : index
    %76 = arith.index_cast %75 : i32 to index
    %c1_69 = arith.constant 1 : index
    %c0_70 = arith.constant 0 : index
    %77 = vector.load %arg2[%c0_68, %76, %c1_69, %c0_70] : memref<1x9x9x4xf32, #tpu.memory_space<vmem>>, vector<1x8x8x4xf32>
    %78 = vector.shape_cast %77 : vector<1x8x8x4xf32> to vector<8x8x4xf32>
    %79 = vector.shape_cast %78 : vector<8x8x4xf32> to vector<64x4xf32>
    %c2_71 = arith.constant 2 : index
    %c2_72 = arith.constant 2 : index
    %c0_73 = arith.constant 0 : index
    %c0_74 = arith.constant 0 : index
    %80 = vector.load %arg6[%c2_71, %c2_72, %c0_73, %c0_74] : memref<3x3x4x8xf32, #tpu.memory_space<vmem>>, vector<1x1x4x8xf32>
    %81 = vector.shape_cast %80 : vector<1x1x4x8xf32> to vector<4x8xf32>
    %cst_75 = arith.constant dense<0.000000e+00> : vector<64x8xf32>
    %82 = tpu.matmul %79, %81, %cst_75 {dimension_numbers = #tpu.dot_dimension_numbers<[1], [0], [0], [1], [0, 0, 1, 1], [], []>} : vector<64x4xf32>, vector<4x8xf32>, vector<64x8xf32> -> vector<64x8xf32>
    %83 = arith.addf %74, %82 : vector<64x8xf32>
    %c0_76 = arith.constant 0 : index
    %c0_77 = arith.constant 0 : index
    %84 = vector.load %arg7[%c0_76, %c0_77] : memref<1x8xf32, #tpu.memory_space<vmem>>, vector<1x8xf32>
    %85 = vector.broadcast %84 : vector<1x8xf32> to vector<64x8xf32>
    %86 = arith.addf %83, %85 : vector<64x8xf32>
    %87 = vector.shape_cast %86 : vector<64x8xf32> to vector<8x8x8xf32>
    %c0_78 = arith.constant 0 : index
    %c0_79 = arith.constant 0 : index
    %c0_80 = arith.constant 0 : index
    %c0_81 = arith.constant 0 : index
    %88 = vector.load %arg8[%c0_78, %c0_79, %c0_80, %c0_81] : memref<1x8x8x8xf32, #tpu.memory_space<vmem>>, vector<1x8x8x8xf32>
    %89 = vector.shape_cast %88 : vector<1x8x8x8xf32> to vector<8x8x8xf32>
    %90 = vector.shape_cast %87 : vector<8x8x8xf32> to vector<1x8x8x8xf32>
    tpu.vector_store %arg8[%c0_78, %c0_79, %c0_80, %c0_81], %90 {strides = array<i32>} : memref<1x8x8x8xf32, #tpu.memory_space<vmem>>, vector<1x8x8x8xf32>,
    return
  }
  func.func @transform_0(%arg0: i32, %arg1: i32) -> (i32, i32, i32, i32) {
    %c0_i32 = arith.constant 0 : i32
    %c0_i32_0 = arith.constant 0 : i32
    %c0_i32_1 = arith.constant 0 : i32
    %c0_i32_2 = arith.constant 0 : i32
    return %arg0, %c0_i32, %c0_i32_0, %c0_i32_1 : i32, i32, i32, i32
  }
  func.func @transform_1(%arg0: i32, %arg1: i32) -> (i32, i32, i32, i32) {
    %c0_i32 = arith.constant 0 : i32
    %c0_i32_0 = arith.constant 0 : i32
    %c0_i32_1 = arith.constant 0 : i32
    %c0_i32_2 = arith.constant 0 : i32
    return %arg0, %c0_i32, %c0_i32_0, %c0_i32_1 : i32, i32, i32, i32
  }
  func.func @transform_2(%arg0: i32, %arg1: i32) -> (i32, i32, i32, i32) {
    %c0_i32 = arith.constant 0 : i32
    %c0_i32_0 = arith.constant 0 : i32
    %c0_i32_1 = arith.constant 0 : i32
    %c0_i32_2 = arith.constant 0 : i32
    return %arg0, %c0_i32, %c0_i32_0, %c0_i32_1 : i32, i32, i32, i32
  }
  func.func @transform_3(%arg0: i32, %arg1: i32) -> (i32, i32, i32, i32) {
    %c0_i32 = arith.constant 0 : i32
    %c0_i32_0 = arith.constant 0 : i32
    %c0_i32_1 = arith.constant 0 : i32
    %c0_i32_2 = arith.constant 0 : i32
    return %arg0, %c0_i32, %c0_i32_0, %c0_i32_1 : i32, i32, i32, i32
  }
  func.func @transform_4(%arg0: i32, %arg1: i32) -> (i32, i32, i32, i32) {
    %c0_i32 = arith.constant 0 : i32
    %c0_i32_0 = arith.constant 0 : i32
    %c0_i32_1 = arith.constant 0 : i32
    %c0_i32_2 = arith.constant 0 : i32
    %c0_i32_3 = arith.constant 0 : i32
    return %c0_i32, %c0_i32_0, %c0_i32_1, %c0_i32_2 : i32, i32, i32, i32
  }
  func.func @transform_5(%arg0: i32, %arg1: i32) -> (i32, i32) {
    %c0_i32 = arith.constant 0 : i32
    %c0_i32_0 = arith.constant 0 : i32
    %c0_i32_1 = arith.constant 0 : i32
    return %c0_i32, %c0_i32_0 : i32, i32
  }
  func.func @transform_6(%arg0: i32, %arg1: i32) -> (i32, i32, i32, i32) {
    %c0_i32 = arith.constant 0 : i32
    %c0_i32_0 = arith.constant 0 : i32
    %c0_i32_1 = arith.constant 0 : i32
    return %arg0, %arg1, %c0_i32, %c0_i32_0 : i32, i32, i32, i32
  }
}

</mosaic_0001>

<llo_original>
// kernel: downsample_conv.1
$region0: #{downsample_conv.1}
  #allocation0 [shape = 'u32[]', space=smem, size = 0x4, offset = 0x4, fixed_abs, tag = 'smem constant byte address 0x4 - core index']
  #allocation1 [shape = 'u32[144,128]{1,0:T(1,128)}', space=vmem, size = 0x12000, scoped, tag = 'internal scratch']
  %s0 = inlined_call_operand.vmem [shape: f32[2,9,9,4], index: 0, kind: input, shape index: {}]
  %s1 = inlined_call_operand.vmem [shape: f32[2,9,8,4], index: 1, kind: input, shape index: {}]
  %s2 = inlined_call_operand.vmem [shape: f32[2,8,9,4], index: 2, kind: input, shape index: {}]
  %s3 = inlined_call_operand.vmem [shape: f32[2,8,8,4], index: 3, kind: input, shape index: {}]
  %s4 = inlined_call_operand.vmem [shape: f32[3,3,4,8], index: 4, kind: input, shape index: {}]
  %s5 = inlined_call_operand.vmem [shape: f32[1,8], index: 5, kind: input, shape index: {}]
  %s6 = inlined_call_operand.vmem [shape: f32[2,8,8,8], index: 6, kind: output, shape index: {}]
  %s7 = sld [smem:[#allocation0]]
  $region57: #{downsample_conv.1} parent=0
    _
  %s9 = ssub.s32 1, %s7
  %s10 = scalar_select 0, %s9, %s7
  loop: start=0, step=1, limit=4
  $region2: #{downsample_conv.1} parent=0 // loop_pre_header
    _
  $region3: #{downsample_conv.1} parent=0 // loop_header
    %s12 = sphi 0, %s16
    %p13 = scmp.ge.s32.totalorder %s12, 4
    %s19 = sphi 0, %s31
    %s20 = sphi 0, %s27
    %s21 = sphi 0, %s19
    %s22 = sphi 0, %s20
    %s23 = sphi 0, %s21
    %s24 = sphi 0, %s22
    %s34 = sphi 0, %s36
    %s37 = sphi 0, %s34
    %s38 = sphi 0, %s37
    %s54 = sphi 0, %s38
    %s60 = sphi 0, %s62
    %s63 = sphi 0, %s60
    %s64 = sphi 0, %s63
    %s80 = sphi 0, %s64
    %s86 = sphi 0, %s88
    %s89 = sphi 0, %s86
    %s90 = sphi 0, %s89
    %s106 = sphi 0, %s90
    %s112 = sphi 0, %s114
    %s115 = sphi 0, %s112
    %s116 = sphi 0, %s115
    %s132 = sphi 0, %s116
    %s136 = sphi 0, %s136
    %s138 = sphi 0, %s136
    %s139 = sphi 0, %s138
    %s153 = sphi 0, %s139
    %s157 = sphi 0, %s157
    %s159 = sphi 0, %s157
    %s160 = sphi 0, %s159
    %s174 = sphi 0, %s160
    %s182 = sphi 0, %s184
    %s185 = sphi 0, %s182
    %s186 = sphi 0, %s185
    %s202 = sphi 0, %s186
  $region4: #{downsample_conv.1} parent=0 // loop_header_branch
    %15 = sbr.rel (%p13) target = $region8
  $region5: #{downsample_conv.1} parent=0 // loop_body
    %s17 = ssub.s32 %s12, 1
    %s18 = ssub.s32 %s12, 2
    %s25 = sadd.s32 1, %s20
    %p26 = scmp.ge.s32.totalorder %s25, 1
    %s27 = scalar_select %p26, 0, %s25
    %s28 = sadd.s32 1, %s19
    %s29 = scalar_select %p26, %s28, %s19
    %p30 = scmp.ge.s32.totalorder %s29, 2
    %s31 = scalar_select %p30, 0, %s29
    %s32 = ssub.s32 %s19, %s31
    %p33 = scmp.eq.s32.totalorder %s32, 0
    %s35 = sadd.s32 %s34, 1
    %s36 = scalar_select %p33, %s34, %s35
    %p39 = pneg %p33
    %p40 = scmp.eq.s32.totalorder %s12, 1
    %p41 = por %p39, %p40
    %p42 = scmp.ne.s32.totalorder %s34, %s37
    %p43 = scmp.eq.s32.totalorder %s12, 0
    %p44 = por %p42, %p43
    %p45 = scmp.ne.s32.totalorder %s34, %s37
    %p46 = scmp.eq.s32.totalorder %s17, 1
    %p47 = por %p45, %p46
    %p48 = scmp.ne.s32.totalorder %s37, %s38
    %p49 = scmp.eq.s32.totalorder %s17, 0
    %p50 = por %p48, %p49
    %p51 = scmp.ne.s32.totalorder %s37, %s38
    %p52 = scmp.eq.s32.totalorder %s18, 1
    %p53 = por %p51, %p52
    %p55 = scmp.ne.s32.totalorder %s38, %s54
    %p56 = scmp.eq.s32.totalorder %s18, 0
    %p57 = por %p55, %p56
    %s58 = ssub.s32 %s19, %s31
    %p59 = scmp.eq.s32.totalorder %s58, 0
    %s61 = sadd.s32 %s60, 1
    %s62 = scalar_select %p59, %s60, %s61
    %p65 = pneg %p59
    %p66 = scmp.eq.s32.totalorder %s12, 1
    %p67 = por %p65, %p66
    %p68 = scmp.ne.s32.totalorder %s60, %s63
    %p69 = scmp.eq.s32.totalorder %s12, 0
    %p70 = por %p68, %p69
    %p71 = scmp.ne.s32.totalorder %s60, %s63
    %p72 = scmp.eq.s32.totalorder %s17, 1
    %p73 = por %p71, %p72
    %p74 = scmp.ne.s32.totalorder %s63, %s64
    %p75 = scmp.eq.s32.totalorder %s17, 0
    %p76 = por %p74, %p75
    %p77 = scmp.ne.s32.totalorder %s63, %s64
    %p78 = scmp.eq.s32.totalorder %s18, 1
    %p79 = por %p77, %p78
    %p81 = scmp.ne.s32.totalorder %s64, %s80
    %p82 = scmp.eq.s32.totalorder %s18, 0
    %p83 = por %p81, %p82
    %s84 = ssub.s32 %s19, %s31
    %p85 = scmp.eq.s32.totalorder %s84, 0
    %s87 = sadd.s32 %s86, 1
    %s88 = scalar_select %p85, %s86, %s87
    %p91 = pneg %p85
    %p92 = scmp.eq.s32.totalorder %s12, 1
    %p93 = por %p91, %p92
    %p94 = scmp.ne.s32.totalorder %s86, %s89
    %p95 = scmp.eq.s32.totalorder %s12, 0
    %p96 = por %p94, %p95
    %p97 = scmp.ne.s32.totalorder %s86, %s89
    %p98 = scmp.eq.s32.totalorder %s17, 1
    %p99 = por %p97, %p98
    %p100 = scmp.ne.s32.totalorder %s89, %s90
    %p101 = scmp.eq.s32.totalorder %s17, 0
    %p102 = por %p100, %p101
    %p103 = scmp.ne.s32.totalorder %s89, %s90
    %p104 = scmp.eq.s32.totalorder %s18, 1
    %p105 = por %p103, %p104
    %p107 = scmp.ne.s32.totalorder %s90, %s106
    %p108 = scmp.eq.s32.totalorder %s18, 0
    %p109 = por %p107, %p108
    %s110 = ssub.s32 %s19, %s31
    %p111 = scmp.eq.s32.totalorder %s110, 0
    %s113 = sadd.s32 %s112, 1
    %s114 = scalar_select %p111, %s112, %s113
    %p117 = pneg %p111
    %p118 = scmp.eq.s32.totalorder %s12, 1
    %p119 = por %p117, %p118
    %p120 = scmp.ne.s32.totalorder %s112, %s115
    %p121 = scmp.eq.s32.totalorder %s12, 0
    %p122 = por %p120, %p121
    %p123 = scmp.ne.s32.totalorder %s112, %s115
    %p124 = scmp.eq.s32.totalorder %s17, 1
    %p125 = por %p123, %p124
    %p126 = scmp.ne.s32.totalorder %s115, %s116
    %p127 = scmp.eq.s32.totalorder %s17, 0
    %p128 = por %p126, %p127
    %p129 = scmp.ne.s32.totalorder %s115, %s116
    %p130 = scmp.eq.s32.totalorder %s18, 1
    %p131 = por %p129, %p130
    %p133 = scmp.ne.s32.totalorder %s116, %s132
    %p134 = scmp.eq.s32.totalorder %s18, 0
    %p135 = por %p133, %p134
    %s137 = sadd.s32 %s136, 1
    %p140 = scmp.eq.s32.totalorder %s12, 1
    %p141 = scmp.ne.s32.totalorder %s136, %s138
    %p142 = scmp.eq.s32.totalorder %s12, 0
    %p143 = por %p141, %p142
    %p144 = scmp.ne.s32.totalorder %s136, %s138
    %p145 = scmp.eq.s32.totalorder %s17, 1
    %p146 = por %p144, %p145
    %p147 = scmp.ne.s32.totalorder %s138, %s139
    %p148 = scmp.eq.s32.totalorder %s17, 0
    %p149 = por %p147, %p148
    %p150 = scmp.ne.s32.totalorder %s138, %s139
    %p151 = scmp.eq.s32.totalorder %s18, 1
    %p152 = por %p150, %p151
    %p154 = scmp.ne.s32.totalorder %s139, %s153
    %p155 = scmp.eq.s32.totalorder %s18, 0
    %p156 = por %p154, %p155
    %s158 = sadd.s32 %s157, 1
    %p161 = scmp.eq.s32.totalorder %s12, 1
    %p162 = scmp.ne.s32.totalorder %s157, %s159
    %p163 = scmp.eq.s32.totalorder %s12, 0
    %p164 = por %p162, %p163
    %p165 = scmp.ne.s32.totalorder %s157, %s159
    %p166 = scmp.eq.s32.totalorder %s17, 1
    %p167 = por %p165, %p166
    %p168 = scmp.ne.s32.totalorder %s159, %s160
    %p169 = scmp.eq.s32.totalorder %s17, 0
    %p170 = por %p168, %p169
    %p171 = scmp.ne.s32.totalorder %s159, %s160
    %p172 = scmp.eq.s32.totalorder %s18, 1
    %p173 = por %p171, %p172
    %p175 = scmp.ne.s32.totalorder %s160, %s174
    %p176 = scmp.eq.s32.totalorder %s18, 0
    %p177 = por %p175, %p176
    %s178 = ssub.s32 %s19, %s31
    %s179 = ssub.s32 %s20, %s27
    %s180 = sor.u32 %s178, %s179
    %p181 = scmp.eq.s32.totalorder %s180, 0
    %s183 = sadd.s32 %s182, 1
    %s184 = scalar_select %p181, %s182, %s183
    %p187 = pneg %p181
    %p188 = scmp.eq.s32.totalorder %s12, 1
    %p189 = por %p187, %p188
    %p190 = scmp.ne.s32.totalorder %s182, %s185
    %p191 = scmp.eq.s32.totalorder %s12, 0
    %p192 = por %p190, %p191
    %p193 = scmp.ne.s32.totalorder %s182, %s185
    %p194 = scmp.eq.s32.totalorder %s17, 1
    %p195 = por %p193, %p194
    %p196 = scmp.ne.s32.totalorder %s185, %s186
    %p197 = scmp.eq.s32.totalorder %s17, 0
    %p198 = por %p196, %p197
    %p199 = scmp.ne.s32.totalorder %s185, %s186
    %p200 = scmp.eq.s32.totalorder %s18, 1
    %p201 = por %p199, %p200
    %p203 = scmp.ne.s32.totalorder %s186, %s202
    %p204 = scmp.eq.s32.totalorder %s18, 0
    %p205 = por %p203, %p204
    %p206 = scmp.le.s32.totalorder 1, %s12
    %p207 = scmp.lt.s32.totalorder %s12, 3
    %p208 = pnand %p206, %p207
    %p209 = pneg %p208
    // Predicated region
    $region9: #{downsample_conv.1} parent=5 // pred_check
      _
    $region10: #{downsample_conv.1} parent=5 // pred_check_branch
      %211 = sbr.rel (%p208) target = $region12
    $region11: #{downsample_conv.1} parent=5 // pred_region
      %s212 = ssub.s32 %s12, 1
      // Predicated region
      $region13: #{downsample_conv.1} parent=11 // pred_check
        %p213 = pneg %p149
      $region14: #{downsample_conv.1} parent=11 // pred_check_branch
        %215 = sbr.rel (%p213) target = $region16
      $region15: #{downsample_conv.1} parent=11 // pred_region
        _
      $region16: #{downsample_conv.1} parent=11 // pred_fallthru
        _
      // Predicated region
      $region17: #{downsample_conv.1} parent=11 // pred_check
        %p216 = pneg %p170
      $region18: #{downsample_conv.1} parent=11 // pred_check_branch
        %218 = sbr.rel (%p216) target = $region20
      $region19: #{downsample_conv.1} parent=11 // pred_region
        _
      $region20: #{downsample_conv.1} parent=11 // pred_fallthru
        _
    $region12: #{downsample_conv.1} parent=5 // pred_fallthru
      _
    %p219 = scmp.lt.s32.totalorder %s12, 2
    // Predicated region
    $region21: #{downsample_conv.1} parent=5 // pred_check
      %p220 = pneg %p219
    $region22: #{downsample_conv.1} parent=5 // pred_check_branch
      %222 = sbr.rel (%p220) target = $region24
    $region23: #{downsample_conv.1} parent=5 // pred_region
      // Predicated region
      $region25: #{downsample_conv.1} parent=23 // pred_check
        %p223 = pneg %p44
      $region26: #{downsample_conv.1} parent=23 // pred_check_branch
        %225 = sbr.rel (%p223) target = $region28
      $region27: #{downsample_conv.1} parent=23 // pred_region
        %p226 = scmp.lt.s32.totalorder %s19, 1
        %s227 = scalar_select %p226, %s19, 1
        %s228 = smul.addr %s227, 18
        %s229 = smul.addr %s228, 8
        %s230 = scalar_lea.vmem %s0, %s229
      $region28: #{downsample_conv.1} parent=23 // pred_fallthru
        _
      // Predicated region
      $region29: #{downsample_conv.1} parent=23 // pred_check
        %p231 = pneg %p70
      $region30: #{downsample_conv.1} parent=23 // pred_check_branch
        %233 = sbr.rel (%p231) target = $region32
      $region31: #{downsample_conv.1} parent=23 // pred_region
        %p234 = scmp.lt.s32.totalorder %s19, 1
        %s235 = scalar_select %p234, %s19, 1
        %s236 = smul.addr %s235, 9
        %s237 = smul.addr %s236, 8
        %s238 = scalar_lea.vmem %s1, %s237
      $region32: #{downsample_conv.1} parent=23 // pred_fallthru
        _
      // Predicated region
      $region33: #{downsample_conv.1} parent=23 // pred_check
        %p239 = pneg %p96
      $region34: #{downsample_conv.1} parent=23 // pred_check_branch
        %241 = sbr.rel (%p239) target = $region36
      $region35: #{downsample_conv.1} parent=23 // pred_region
        %p242 = scmp.lt.s32.totalorder %s19, 1
        %s243 = scalar_select %p242, %s19, 1
        %s244 = smul.addr %s243, 16
        %s245 = smul.addr %s244, 8
        %s246 = scalar_lea.vmem %s2, %s245
      $region36: #{downsample_conv.1} parent=23 // pred_fallthru
        _
      // Predicated region
      $region37: #{downsample_conv.1} parent=23 // pred_check
        %p247 = pneg %p122
      $region38: #{downsample_conv.1} parent=23 // pred_check_branch
        %249 = sbr.rel (%p247) target = $region40
      $region39: #{downsample_conv.1} parent=23 // pred_region
        %p250 = scmp.lt.s32.totalorder %s19, 1
        %s251 = scalar_select %p250, %s19, 1
        %s252 = smul.addr %s251, 8
        %s253 = smul.addr %s252, 8
        %s254 = scalar_lea.vmem %s3, %s253
      $region40: #{downsample_conv.1} parent=23 // pred_fallthru
        _
    $region24: #{downsample_conv.1} parent=5 // pred_fallthru
      _
    %p255 = scmp.le.s32.totalorder 1, %s12
    %p256 = scmp.lt.s32.totalorder %s12, 3
    %p257 = pnand %p255, %p256
    %p258 = pneg %p257
    // Predicated region
    $region41: #{downsample_conv.1} parent=5 // pred_check
      _
    $region42: #{downsample_conv.1} parent=5 // pred_check_branch
      %260 = sbr.rel (%p257) target = $region44
    $region43: #{downsample_conv.1} parent=5 // pred_region
      %s261 = ssub.s32 %s12, 1
      %p262 = scmp.lt.s32.totalorder %s21, 1
      %s263 = scalar_select %p262, %s21, 1
      %s264 = smul.addr %s263, 18
      %s265 = smul.addr %s264, 8
      %s266 = scalar_lea.vmem %s0, %s265
      %p267 = pneg %p50
      %p268 = pneg %p47
      %p269 = scmp.lt.s32.totalorder %s21, 1
      %s270 = scalar_select %p269, %s21, 1
      %s271 = smul.addr %s270, 9
      %s272 = smul.addr %s271, 8
      %s273 = scalar_lea.vmem %s1, %s272
      %p274 = pneg %p76
      %p275 = pneg %p73
      %p276 = scmp.lt.s32.totalorder %s21, 1
      %s277 = scalar_select %p276, %s21, 1
      %s278 = smul.addr %s277, 16
      %s279 = smul.addr %s278, 8
      %s280 = scalar_lea.vmem %s2, %s279
      %p281 = pneg %p102
      %p282 = pneg %p99
      %p283 = scmp.lt.s32.totalorder %s21, 1
      %s284 = scalar_select %p283, %s21, 1
      %s285 = smul.addr %s284, 8
      %s286 = smul.addr %s285, 8
      %s287 = scalar_lea.vmem %s3, %s286
      %p288 = pneg %p128
      %p289 = pneg %p125
      %p290 = pneg %p149
      %p291 = pneg %p146
      %p292 = pneg %p170
      %p293 = pneg %p167
      %p294 = pneg %p198
      %p295 = pneg %p195
      %s296 = smul.u32 8, %s22
      %p297 = scmp.lt.s32.totalorder %s21, 1
      %s298 = scalar_select %p297, %s21, 1
      %p299 = scmp.lt.s32.totalorder %s296, 7
      %s300 = scalar_select %p299, %s296, 7
      %s301 = smul.addr %s298, 8
      %s302 = sadd.s32 %s300, %s301
      %s303 = smul.addr %s302, 8
      %s304 = scalar_lea.vmem %s6, %s303
      %p305 = scmp.lt.s32.totalorder %s21, 1
      %s306 = scalar_select %p305, %s21, 1
      %s307 = smul.addr %s306, 18
      %s308 = smul.addr %s307, 8
      %s309 = scalar_lea.vmem %s0, %s308
      %p310 = scmp.lt.s32.totalorder %s21, 1
      %s311 = scalar_select %p310, %s21, 1
      %s312 = smul.addr %s311, 9
      %s313 = smul.addr %s312, 8
      %s314 = scalar_lea.vmem %s1, %s313
      %p315 = scmp.lt.s32.totalorder %s21, 1
      %s316 = scalar_select %p315, %s21, 1
      %s317 = smul.addr %s316, 16
      %s318 = smul.addr %s317, 8
      %s319 = scalar_lea.vmem %s2, %s318
      %p320 = scmp.lt.s32.totalorder %s21, 1
      %s321 = scalar_select %p320, %s21, 1
      %s322 = smul.addr %s321, 8
      %s323 = smul.addr %s322, 8
      %s324 = scalar_lea.vmem %s3, %s323
      %s325 = smul.u32 8, %s22
      %p326 = scmp.lt.s32.totalorder %s21, 1
      %s327 = scalar_select %p326, %s21, 1
      %p328 = scmp.lt.s32.totalorder %s325, 7
      %s329 = scalar_select %p328, %s325, 7
      %s330 = smul.addr %s327, 8
      %s331 = sadd.s32 %s329, %s330
      %s332 = smul.addr %s331, 8
      %s333 = scalar_lea.vmem %s6, %s332
      %s334 = smul.u32 8, %s22
      %s335 = smul.u32 %s22, 8
      %s336 = smul.u32 %s335, 16
      %s337 = scalar_lea.vmem %s309, %s336
      %v338 = vld [vmem:[%s337] sm:$0xff]
      %v339 = vld [vmem:[%s337 + $0x10] sm:$0xff]
      %v340 = vld [vmem:[%s337 + $0x20] sm:$0xff]
      %v341 = vld [vmem:[%s337 + $0x30] sm:$0xff]
      %v342 = vld [vmem:[%s337 + $0x40] sm:$0xff]
      %v343 = vld [vmem:[%s337 + $0x50] sm:$0xff]
      %v344 = vld [vmem:[%s337 + $0x60] sm:$0xff]
      %v345 = vld [vmem:[%s337 + $0x70] sm:$0xff]
      %v346 = vld [vmem:[%s4] sm:$0xf]
      %s347 = smul.u32 %s335, 8
      %s348 = scalar_lea.vmem %s314, %s347
      %v349 = vld [vmem:[%s348] sm:$0xff]
      %v350 = vld [vmem:[%s348 + $0x8] sm:$0xff]
      %v351 = vld [vmem:[%s348 + $0x10] sm:$0xff]
      %v352 = vld [vmem:[%s348 + $0x18] sm:$0xff]
      %v353 = vld [vmem:[%s348 + $0x20] sm:$0xff]
      %v354 = vld [vmem:[%s348 + $0x28] sm:$0xff]
      %v355 = vld [vmem:[%s348 + $0x30] sm:$0xff]
      %v356 = vld [vmem:[%s348 + $0x38] sm:$0xff]
      %s357 = scalar_lea.vmem %s4, 4
      %v358 = vld [vmem:[%s357] sm:$0xf]
      %vm359 = vcmask 31744
      %v361 = vsel %vm359, %v349, 0
      %v364 = vsel %vm359, %v350, 0
      %v367 = vsel %vm359, %v351, 0
      %v370 = vsel %vm359, %v352, 0
      %v373 = vsel %vm359, %v353, 0
      %v376 = vsel %vm359, %v354, 0
      %v379 = vsel %vm359, %v355, 0
      %v382 = vsel %vm359, %v356, 0
      %vm384 = vcmask 1043456
      %v386 = vsel %vm384, %v358, 0
      %388 = vmatprep.subr.mxu0 0.0
      %389 = vmatpush1.msra.mxu0 %v386
      %390 = vmatprep.subr.mxu0 0.0
      %391 = vmatpush1.msra.mxu0 0.0
      %392 = vmatprep.subr.mxu0 0.0
      %393 = vmatpush1.msra.mxu0 0.0
      %394 = vmatprep.subr.mxu0 0.0
      %395 = vmatpush1.msra.mxu0 0.0
      %396 = vmatprep.subr.mxu0 0.0
      %397 = vmatpush1.msra.mxu0 0.0
      %398 = vmatprep.subr.mxu0 0.0
      %399 = vmatpush1.msra.mxu0 0.0
      %400 = vmatprep.subr.mxu0 0.0
      %401 = vmatpush1.msra.mxu0 0.0
      %402 = vmatprep.subr.mxu0 0.0
      %403 = vmatpush1.msra.mxu0 0.0
      %404 = vmatprep.subr.mxu0 0.0
      %405 = vmatpush1.msra.mxu0 0.0
      %406 = vmatprep.subr.mxu0 0.0
      %407 = vmatpush1.msra.mxu0 0.0
      %408 = vmatprep.subr.mxu0 0.0
      %409 = vmatpush1.msra.mxu0 0.0
      %410 = vmatprep.subr.mxu0 0.0
      %411 = vmatpush1.msra.mxu0 0.0
      %412 = vmatprep.subr.mxu0 0.0
      %413 = vmatpush1.msra.mxu0 0.0
      %414 = vmatprep.subr.mxu0 0.0
      %415 = vmatpush1.msra.mxu0 0.0
      %416 = vmatprep.subr.mxu0 0.0
      %417 = vmatpush1.msra.mxu0 0.0
      %418 = vmatprep.subr.mxu0 0.0
      %419 = vmatpush1.msra.mxu0 0.0
      %420 = vmatprep.subr.mxu0 0.0
      %421 = vmatpush1.msra.mxu0 0.0
      %422 = vmatprep.subr.mxu0 0.0
      %423 = vmatpush1.msra.mxu0 0.0
      %424 = vmatprep.subr.mxu0 0.0
      %425 = vmatpush1.msra.mxu0 0.0
      %426 = vmatprep.subr.mxu0 0.0
      %427 = vmatpush1.msra.mxu0 0.0
      %428 = vmatprep.subr.mxu0 0.0
      %429 = vmatpush1.msra.mxu0 0.0
      %430 = vmatprep.subr.mxu0 0.0
      %431 = vmatpush1.msra.mxu0 0.0
      %432 = vmatprep.subr.mxu0 0.0
      %433 = vmatpush1.msra.mxu0 0.0
      %434 = vmatprep.subr.mxu0 0.0
      %435 = vmatpush1.msra.mxu0 0.0
      %436 = vmatprep.subr.mxu0 0.0
      %437 = vmatpush1.msra.mxu0 0.0
      %438 = vmatprep.subr.mxu0 0.0
      %439 = vmatpush1.msra.mxu0 0.0
      %440 = vmatprep.subr.mxu0 0.0
      %441 = vmatpush1.msra.mxu0 0.0
      %442 = vmatprep.subr.mxu0 0.0
      %443 = vmatpush1.msra.mxu0 0.0
      %444 = vmatprep.subr.mxu0 0.0
      %445 = vmatpush1.msra.mxu0 0.0
      %446 = vmatprep.subr.mxu0 0.0
      %447 = vmatpush1.msra.mxu0 0.0
      %448 = vmatprep.subr.mxu0 0.0
      %449 = vmatpush1.msra.mxu0 0.0
      %450 = vmatprep.subr.mxu0 0.0
      %451 = vmatpush1.msra.mxu0 0.0
      %452 = vmatprep.mubr.f32.mxu0 0.0
      %453 = vmatmul.mubr.f32.gmra.mrb[0].mxu0 %v361
      %v454 = vpop.f32.mrb[0].mxu0
      %v455 = vadd.f32 0.0, %v454
      %v456 = vpop.f32.mrb[0].mxu0
      %457 = vmatprep.mubr.f32.mxu0 0.0
      %458 = vmatmul.mubr.f32.gmra.mrb[0].mxu0 %v364
      %v459 = vpop.f32.mrb[0].mxu0
      %v460 = vadd.f32 0.0, %v459
      %v461 = vpop.f32.mrb[0].mxu0
      %462 = vmatprep.mubr.f32.mxu0 0.0
      %463 = vmatmul.mubr.f32.gmra.mrb[0].mxu0 %v367
      %v464 = vpop.f32.mrb[0].mxu0
      %v465 = vadd.f32 0.0, %v464
      %v466 = vpop.f32.mrb[0].mxu0
      %467 = vmatprep.mubr.f32.mxu0 0.0
      %468 = vmatmul.mubr.f32.gmra.mrb[0].mxu0 %v370
      %v469 = vpop.f32.mrb[0].mxu0
      %v470 = vadd.f32 0.0, %v469
      %v471 = vpop.f32.mrb[0].mxu0
      %472 = vmatprep.mubr.f32.mxu0 0.0
      %473 = vmatmul.mubr.f32.gmra.mrb[0].mxu0 %v373
      %v474 = vpop.f32.mrb[0].mxu0
      %v475 = vadd.f32 0.0, %v474
      %v476 = vpop.f32.mrb[0].mxu0
      %477 = vmatprep.mubr.f32.mxu0 0.0
      %478 = vmatmul.mubr.f32.gmra.mrb[0].mxu0 %v376
      %v479 = vpop.f32.mrb[0].mxu0
      %v480 = vadd.f32 0.0, %v479
      %v481 = vpop.f32.mrb[0].mxu0
      %482 = vmatprep.mubr.f32.mxu0 0.0
      %483 = vmatmul.mubr.f32.gmra.mrb[0].mxu0 %v379
      %v484 = vpop.f32.mrb[0].mxu0
      %v485 = vadd.f32 0.0, %v484
      %v486 = vpop.f32.mrb[0].mxu0
      %487 = vmatprep.mubr.f32.mxu0 0.0
      %488 = vmatmul.mubr.f32.gmra.mrb[0].mxu0 %v382
      %v489 = vpop.f32.mrb[0].mxu0
      %v490 = vadd.f32 0.0, %v489
      %v491 = vpop.f32.mrb[0].mxu0
      %492 = vdwg.mxu0
      %v494 = vsel %vm359, %v338, 0
      %v497 = vsel %vm359, %v339, 0
      %v500 = vsel %vm359, %v340, 0
      %v503 = vsel %vm359, %v341, 0
      %v506 = vsel %vm359, %v342, 0
      %v509 = vsel %vm359, %v343, 0
      %v512 = vsel %vm359, %v344, 0
      %v515 = vsel %vm359, %v345, 0
      %v518 = vsel %vm384, %v346, 0
      %520 = vmatprep.subr.mxu0 0.0
      %521 = vmatpush1.msra.mxu0 %v518
      %522 = vmatprep.subr.mxu0 0.0
      %523 = vmatpush1.msra.mxu0 0.0
      %524 = vmatprep.subr.mxu0 0.0
      %525 = vmatpush1.msra.mxu0 0.0
      %526 = vmatprep.subr.mxu0 0.0
      %527 = vmatpush1.msra.mxu0 0.0
      %528 = vmatprep.subr.mxu0 0.0
      %529 = vmatpush1.msra.mxu0 0.0
      %530 = vmatprep.subr.mxu0 0.0
      %531 = vmatpush1.msra.mxu0 0.0
      %532 = vmatprep.subr.mxu0 0.0
      %533 = vmatpush1.msra.mxu0 0.0
      %534 = vmatprep.subr.mxu0 0.0
      %535 = vmatpush1.msra.mxu0 0.0
      %536 = vmatprep.subr.mxu0 0.0
      %537 = vmatpush1.msra.mxu0 0.0
      %538 = vmatprep.subr.mxu0 0.0
      %539 = vmatpush1.msra.mxu0 0.0
      %540 = vmatprep.subr.mxu0 0.0
      %541 = vmatpush1.msra.mxu0 0.0
      %542 = vmatprep.subr.mxu0 0.0
      %543 = vmatpush1.msra.mxu0 0.0
      %544 = vmatprep.subr.mxu0 0.0
      %545 = vmatpush1.msra.mxu0 0.0
      %546 = vmatprep.subr.mxu0 0.0
      %547 = vmatpush1.msra.mxu0 0.0
      %548 = vmatprep.subr.mxu0 0.0
      %549 = vmatpush1.msra.mxu0 0.0
      %550 = vmatprep.subr.mxu0 0.0
      %551 = vmatpush1.msra.mxu0 0.0
      %552 = vmatprep.subr.mxu0 0.0
      %553 = vmatpush1.msra.mxu0 0.0
      %554 = vmatprep.subr.mxu0 0.0
      %555 = vmatpush1.msra.mxu0 0.0
      %556 = vmatprep.subr.mxu0 0.0
      %557 = vmatpush1.msra.mxu0 0.0
      %558 = vmatprep.subr.mxu0 0.0
      %559 = vmatpush1.msra.mxu0 0.0
      %560 = vmatprep.subr.mxu0 0.0
      %561 = vmatpush1.msra.mxu0 0.0
      %562 = vmatprep.subr.mxu0 0.0
      %563 = vmatpush1.msra.mxu0 0.0
      %564 = vmatprep.subr.mxu0 0.0
      %565 = vmatpush1.msra.mxu0 0.0
      %566 = vmatprep.subr.mxu0 0.0
      %567 = vmatpush1.msra.mxu0 0.0
      %568 = vmatprep.subr.mxu0 0.0
      %569 = vmatpush1.msra.mxu0 0.0
      %570 = vmatprep.subr.mxu0 0.0
      %571 = vmatpush1.msra.mxu0 0.0
      %572 = vmatprep.subr.mxu0 0.0
      %573 = vmatpush1.msra.mxu0 0.0
      %574 = vmatprep.subr.mxu0 0.0
      %575 = vmatpush1.msra.mxu0 0.0
      %576 = vmatprep.subr.mxu0 0.0
      %577 = vmatpush1.msra.mxu0 0.0
      %578 = vmatprep.subr.mxu0 0.0
      %579 = vmatpush1.msra.mxu0 0.0
      %580 = vmatprep.subr.mxu0 0.0
      %581 = vmatpush1.msra.mxu0 0.0
      %582 = vmatprep.subr.mxu0 0.0
      %583 = vmatpush1.msra.mxu0 0.0
      %584 = vmatprep.mubr.f32.mxu0 0.0
      %585 = vmatmul.mubr.f32.gmra.mrb[0].mxu0 %v494
      %v586 = vpop.f32.mrb[0].mxu0
      %v587 = vadd.f32 %v455, %v586
      %v588 = vpop.f32.mrb[0].mxu0
      %589 = vmatprep.mubr.f32.mxu0 0.0
      %590 = vmatmul.mubr.f32.gmra.mrb[0].mxu0 %v497
      %v591 = vpop.f32.mrb[0].mxu0
      %v592 = vadd.f32 %v460, %v591
      %v593 = vpop.f32.mrb[0].mxu0
      %594 = vmatprep.mubr.f32.mxu0 0.0
      %595 = vmatmul.mubr.f32.gmra.mrb[0].mxu0 %v500
      %v596 = vpop.f32.mrb[0].mxu0
      %v597 = vadd.f32 %v465, %v596
      %v598 = vpop.f32.mrb[0].mxu0
      %599 = vmatprep.mubr.f32.mxu0 0.0
      %600 = vmatmul.mubr.f32.gmra.mrb[0].mxu0 %v503
      %v601 = vpop.f32.mrb[0].mxu0
      %v602 = vadd.f32 %v470, %v601
      %v603 = vpop.f32.mrb[0].mxu0
      %604 = vmatprep.mubr.f32.mxu0 0.0
      %605 = vmatmul.mubr.f32.gmra.mrb[0].mxu0 %v506
      %v606 = vpop.f32.mrb[0].mxu0
      %v607 = vadd.f32 %v475, %v606
      %v608 = vpop.f32.mrb[0].mxu0
      %609 = vmatprep.mubr.f32.mxu0 0.0
      %610 = vmatmul.mubr.f32.gmra.mrb[0].mxu0 %v509
      %v611 = vpop.f32.mrb[0].mxu0
      %v612 = vadd.f32 %v480, %v611
      %v613 = vpop.f32.mrb[0].mxu0
      %614 = vmatprep.mubr.f32.mxu0 0.0
      %615 = vmatmul.mubr.f32.gmra.mrb[0].mxu0 %v512
      %v616 = vpop.f32.mrb[0].mxu0
      %v617 = vadd.f32 %v485, %v616
      %v618 = vpop.f32.mrb[0].mxu0
      %619 = vmatprep.mubr.f32.mxu0 0.0
      %620 = vmatmul.mubr.f32.gmra.mrb[0].mxu0 %v515
      %v621 = vpop.f32.mrb[0].mxu0
      %v622 = vadd.f32 %v490, %v621
      %v623 = vpop.f32.mrb[0].mxu0
      %624 = vdwg.mxu0
      %v625 = vld [vmem:[%s337 + $0x1] sm:$0xff]
      %v626 = vld [vmem:[%s337 + $0x11] sm:$0xff]
      %v627 = vld [vmem:[%s337 + $0x21] sm:$0xff]
      %v628 = vld [vmem:[%s337 + $0x31] sm:$0xff]
      %v629 = vld [vmem:[%s337 + $0x41] sm:$0xff]
      %v630 = vld [vmem:[%s337 + $0x51] sm:$0xff]
      %v631 = vld [vmem:[%s337 + $0x61] sm:$0xff]
      %v632 = vld [vmem:[%s337 + $0x71] sm:$0xff]
      %s633 = scalar_lea.vmem %s4, 8
      %v634 = vld [vmem:[%s633] sm:$0xf]
      %v636 = vsel %vm359, %v625, 0
      %v639 = vsel %vm359, %v626, 0
      %v642 = vsel %vm359, %v627, 0
      %v645 = vsel %vm359, %v628, 0
      %v648 = vsel %vm359, %v629, 0
      %v651 = vsel %vm359, %v630, 0
      %v654 = vsel %vm359, %v631, 0
      %v657 = vsel %vm359, %v632, 0
      %v660 = vsel %vm384, %v634, 0
      %662 = vmatprep.subr.mxu0 0.0
      %663 = vmatpush1.msra.mxu0 %v660
      %664 = vmatprep.subr.mxu0 0.0
      %665 = vmatpush1.msra.mxu0 0.0
      %666 = vmatprep.subr.mxu0 0.0
      %667 = vmatpush1.msra.mxu0 0.0
      %668 = vmatprep.subr.mxu0 0.0
      %669 = vmatpush1.msra.mxu0 0.0
      %670 = vmatprep.subr.mxu0 0.0
      %671 = vmatpush1.msra.mxu0 0.0
      %672 = vmatprep.subr.mxu0 0.0
      %673 = vmatpush1.msra.mxu0 0.0
      %674 = vmatprep.subr.mxu0 0.0
      %675 = vmatpush1.msra.mxu0 0.0
      %676 = vmatprep.subr.mxu0 0.0
      %677 = vmatpush1.msra.mxu0 0.0
      %678 = vmatprep.subr.mxu0 0.0
      %679 = vmatpush1.msra.mxu0 0.0
      %680 = vmatprep.subr.mxu0 0.0
      %681 = vmatpush1.msra.mxu0 0.0
      %682 = vmatprep.subr.mxu0 0.0
      %683 = vmatpush1.msra.mxu0 0.0
      %684 = vmatprep.subr.mxu0 0.0
      %685 = vmatpush1.msra.mxu0 0.0
      %686 = vmatprep.subr.mxu0 0.0
      %687 = vmatpush1.msra.mxu0 0.0
      %688 = vmatprep.subr.mxu0 0.0
      %689 = vmatpush1.msra.mxu0 0.0
      %690 = vmatprep.subr.mxu0 0.0
      %691 = vmatpush1.msra.mxu0 0.0
      %692 = vmatprep.subr.mxu0 0.0
      %693 = vmatpush1.msra.mxu0 0.0
      %694 = vmatprep.subr.mxu0 0.0
      %695 = vmatpush1.msra.mxu0 0.0
      %696 = vmatprep.subr.mxu0 0.0
      %697 = vmatpush1.msra.mxu0 0.0
      %698 = vmatprep.subr.mxu0 0.0
      %699 = vmatpush1.msra.mxu0 0.0
      %700 = vmatprep.subr.mxu0 0.0
      %701 = vmatpush1.msra.mxu0 0.0
      %702 = vmatprep.subr.mxu0 0.0
      %703 = vmatpush1.msra.mxu0 0.0
      %704 = vmatprep.subr.mxu0 0.0
      %705 = vmatpush1.msra.mxu0 0.0
      %706 = vmatprep.subr.mxu0 0.0
      %707 = vmatpush1.msra.mxu0 0.0
      %708 = vmatprep.subr.mxu0 0.0
      %709 = vmatpush1.msra.mxu0 0.0
      %710 = vmatprep.subr.mxu0 0.0
      %711 = vmatpush1.msra.mxu0 0.0
      %712 = vmatprep.subr.mxu0 0.0
      %713 = vmatpush1.msra.mxu0 0.0
      %714 = vmatprep.subr.mxu0 0.0
      %715 = vmatpush1.msra.mxu0 0.0
      %716 = vmatprep.subr.mxu0 0.0
      %717 = vmatpush1.msra.mxu0 0.0
      %718 = vmatprep.subr.mxu0 0.0
      %719 = vmatpush1.msra.mxu0 0.0
      %720 = vmatprep.subr.mxu0 0.0
      %721 = vmatpush1.msra.mxu0 0.0
      %722 = vmatprep.subr.mxu0 0.0
      %723 = vmatpush1.msra.mxu0 0.0
      %724 = vmatprep.subr.mxu0 0.0
      %725 = vmatpush1.msra.mxu0 0.0
      %726 = vmatprep.mubr.f32.mxu0 0.0
      %727 = vmatmul.mubr.f32.gmra.mrb[0].mxu0 %v636
      %v728 = vpop.f32.mrb[0].mxu0
      %v729 = vadd.f32 0.0, %v728
      %v730 = vpop.f32.mrb[0].mxu0
      %731 = vmatprep.mubr.f32.mxu0 0.0
      %732 = vmatmul.mubr.f32.gmra.mrb[0].mxu0 %v639
      %v733 = vpop.f32.mrb[0].mxu0
      %v734 = vadd.f32 0.0, %v733
      %v735 = vpop.f32.mrb[0].mxu0
      %736 = vmatprep.mubr.f32.mxu0 0.0
      %737 = vmatmul.mubr.f32.gmra.mrb[0].mxu0 %v642
      %v738 = vpop.f32.mrb[0].mxu0
      %v739 = vadd.f32 0.0, %v738
      %v740 = vpop.f32.mrb[0].mxu0
      %741 = vmatprep.mubr.f32.mxu0 0.0
      %742 = vmatmul.mubr.f32.gmra.mrb[0].mxu0 %v645
      %v743 = vpop.f32.mrb[0].mxu0
      %v744 = vadd.f32 0.0, %v743
      %v745 = vpop.f32.mrb[0].mxu0
      %746 = vmatprep.mubr.f32.mxu0 0.0
      %747 = vmatmul.mubr.f32.gmra.mrb[0].mxu0 %v648
      %v748 = vpop.f32.mrb[0].mxu0
      %v749 = vadd.f32 0.0, %v748
      %v750 = vpop.f32.mrb[0].mxu0
      %751 = vmatprep.mubr.f32.mxu0 0.0
      %752 = vmatmul.mubr.f32.gmra.mrb[0].mxu0 %v651
      %v753 = vpop.f32.mrb[0].mxu0
      %v754 = vadd.f32 0.0, %v753
      %v755 = vpop.f32.mrb[0].mxu0
      %756 = vmatprep.mubr.f32.mxu0 0.0
      %757 = vmatmul.mubr.f32.gmra.mrb[0].mxu0 %v654
      %v758 = vpop.f32.mrb[0].mxu0
      %v759 = vadd.f32 0.0, %v758
      %v760 = vpop.f32.mrb[0].mxu0
      %761 = vmatprep.mubr.f32.mxu0 0.0
      %762 = vmatmul.mubr.f32.gmra.mrb[0].mxu0 %v657
      %v763 = vpop.f32.mrb[0].mxu0
      %v764 = vadd.f32 0.0, %v763
      %v765 = vpop.f32.mrb[0].mxu0
      %766 = vdwg.mxu0
      %v767 = vadd.f32 %v587, %v729
      %v768 = vadd.f32 %v592, %v734
      %v769 = vadd.f32 %v597, %v739
      %v770 = vadd.f32 %v602, %v744
      %v771 = vadd.f32 %v607, %v749
      %v772 = vadd.f32 %v612, %v754
      %v773 = vadd.f32 %v617, %v759
      %v774 = vadd.f32 %v622, %v764
      %s775 = scalar_lea.vmem %s319, %s336
      %v776 = vld [vmem:[%s775] sm:$0xff]
      %v777 = vld [vmem:[%s775 + $0x10] sm:$0xff]
      %v778 = vld [vmem:[%s775 + $0x20] sm:$0xff]
      %v779 = vld [vmem:[%s775 + $0x30] sm:$0xff]
      %v780 = vld [vmem:[%s775 + $0x40] sm:$0xff]
      %v781 = vld [vmem:[%s775 + $0x50] sm:$0xff]
      %v782 = vld [vmem:[%s775 + $0x60] sm:$0xff]
      %v783 = vld [vmem:[%s775 + $0x70] sm:$0xff]
      %s784 = scalar_lea.vmem %s4, 12
      %v785 = vld [vmem:[%s784] sm:$0xf]
      %v787 = vsel %vm359, %v776, 0
      %v790 = vsel %vm359, %v777, 0
      %v793 = vsel %vm359, %v778, 0
      %v796 = vsel %vm359, %v779, 0
      %v799 = vsel %vm359, %v780, 0
      %v802 = vsel %vm359, %v781, 0
      %v805 = vsel %vm359, %v782, 0
      %v808 = vsel %vm359, %v783, 0
      %v811 = vsel %vm384, %v785, 0
      %813 = vmatprep.subr.mxu0 0.0
      %814 = vmatpush1.msra.mxu0 %v811
      %815 = vmatprep.subr.mxu0 0.0
      %816 = vmatpush1.msra.mxu0 0.0
      %817 = vmatprep.subr.mxu0 0.0
      %818 = vmatpush1.msra.mxu0 0.0
      %819 = vmatprep.subr.mxu0 0.0
      %820 = vmatpush1.msra.mxu0 0.0
      %821 = vmatprep.subr.mxu0 0.0
      %822 = vmatpush1.msra.mxu0 0.0
      %823 = vmatprep.subr.mxu0 0.0
      %824 = vmatpush1.msra.mxu0 0.0
      %825 = vmatprep.subr.mxu0 0.0
      %826 = vmatpush1.msra.mxu0 0.0
      %827 = vmatprep.subr.mxu0 0.0
      %828 = vmatpush1.msra.mxu0 0.0
      %829 = vmatprep.subr.mxu0 0.0
      %830 = vmatpush1.msra.mxu0 0.0
      %831 = vmatprep.subr.mxu0 0.0
      %832 = vmatpush1.msra.mxu0 0.0
      %833 = vmatprep.subr.mxu0 0.0
      %834 = vmatpush1.msra.mxu0 0.0
      %835 = vmatprep.subr.mxu0 0.0
      %836 = vmatpush1.msra.mxu0 0.0
      %837 = vmatprep.subr.mxu0 0.0
      %838 = vmatpush1.msra.mxu0 0.0
      %839 = vmatprep.subr.mxu0 0.0
      %840 = vmatpush1.msra.mxu0 0.0
      %841 = vmatprep.subr.mxu0 0.0
      %842 = vmatpush1.msra.mxu0 0.0
      %843 = vmatprep.subr.mxu0 0.0
      %844 = vmatpush1.msra.mxu0 0.0
      %845 = vmatprep.subr.mxu0 0.0
      %846 = vmatpush1.msra.mxu0 0.0
      %847 = vmatprep.subr.mxu0 0.0
      %848 = vmatpush1.msra.mxu0 0.0
      %849 = vmatprep.subr.mxu0 0.0
      %850 = vmatpush1.msra.mxu0 0.0
      %851 = vmatprep.subr.mxu0 0.0
      %852 = vmatpush1.msra.mxu0 0.0
      %853 = vmatprep.subr.mxu0 0.0
      %854 = vmatpush1.msra.mxu0 0.0
      %855 = vmatprep.subr.mxu0 0.0
      %856 = vmatpush1.msra.mxu0 0.0
      %857 = vmatprep.subr.mxu0 0.0
      %858 = vmatpush1.msra.mxu0 0.0
      %859 = vmatprep.subr.mxu0 0.0
      %860 = vmatpush1.msra.mxu0 0.0
      %861 = vmatprep.subr.mxu0 0.0
      %862 = vmatpush1.msra.mxu0 0.0
      %863 = vmatprep.subr.mxu0 0.0
      %864 = vmatpush1.msra.mxu0 0.0
      %865 = vmatprep.subr.mxu0 0.0
      %866 = vmatpush1.msra.mxu0 0.0
      %867 = vmatprep.subr.mxu0 0.0
      %868 = vmatpush1.msra.mxu0 0.0
      %869 = vmatprep.subr.mxu0 0.0
      %870 = vmatpush1.msra.mxu0 0.0
      %871 = vmatprep.subr.mxu0 0.0
      %872 = vmatpush1.msra.mxu0 0.0
      %873 = vmatprep.subr.mxu0 0.0
      %874 = vmatpush1.msra.mxu0 0.0
      %875 = vmatprep.subr.mxu0 0.0
      %876 = vmatpush1.msra.mxu0 0.0
      %877 = vmatprep.mubr.f32.mxu0 0.0
      %878 = vmatmul.mubr.f32.gmra.mrb[0].mxu0 %v787
      %v879 = vpop.f32.mrb[0].mxu0
      %v880 = vadd.f32 0.0, %v879
      %v881 = vpop.f32.mrb[0].mxu0
      %882 = vmatprep.mubr.f32.mxu0 0.0
      %883 = vmatmul.mubr.f32.gmra.mrb[0].mxu0 %v790
      %v884 = vpop.f32.mrb[0].mxu0
      %v885 = vadd.f32 0.0, %v884
      %v886 = vpop.f32.mrb[0].mxu0
      %887 = vmatprep.mubr.f32.mxu0 0.0
      %888 = vmatmul.mubr.f32.gmra.mrb[0].mxu0 %v793
      %v889 = vpop.f32.mrb[0].mxu0
      %v890 = vadd.f32 0.0, %v889
      %v891 = vpop.f32.mrb[0].mxu0
      %892 = vmatprep.mubr.f32.mxu0 0.0
      %893 = vmatmul.mubr.f32.gmra.mrb[0].mxu0 %v796
      %v894 = vpop.f32.mrb[0].mxu0
      %v895 = vadd.f32 0.0, %v894
      %v896 = vpop.f32.mrb[0].mxu0
      %897 = vmatprep.mubr.f32.mxu0 0.0
      %898 = vmatmul.mubr.f32.gmra.mrb[0].mxu0 %v799
      %v899 = vpop.f32.mrb[0].mxu0
      %v900 = vadd.f32 0.0, %v899
      %v901 = vpop.f32.mrb[0].mxu0
      %902 = vmatprep.mubr.f32.mxu0 0.0
      %903 = vmatmul.mubr.f32.gmra.mrb[0].mxu0 %v802
      %v904 = vpop.f32.mrb[0].mxu0
      %v905 = vadd.f32 0.0, %v904
      %v906 = vpop.f32.mrb[0].mxu0
      %907 = vmatprep.mubr.f32.mxu0 0.0
      %908 = vmatmul.mubr.f32.gmra.mrb[0].mxu0 %v805
      %v909 = vpop.f32.mrb[0].mxu0
      %v910 = vadd.f32 0.0, %v909
      %v911 = vpop.f32.mrb[0].mxu0
      %912 = vmatprep.mubr.f32.mxu0 0.0
      %913 = vmatmul.mubr.f32.gmra.mrb[0].mxu0 %v808
      %v914 = vpop.f32.mrb[0].mxu0
      %v915 = vadd.f32 0.0, %v914
      %v916 = vpop.f32.mrb[0].mxu0
      %917 = vdwg.mxu0
      %v918 = vadd.f32 %v767, %v880
      %v919 = vadd.f32 %v768, %v885
      %v920 = vadd.f32 %v769, %v890
      %v921 = vadd.f32 %v770, %v895
      %v922 = vadd.f32 %v771, %v900
      %v923 = vadd.f32 %v772, %v905
      %v924 = vadd.f32 %v773, %v910
      %v925 = vadd.f32 %v774, %v915
      %s926 = scalar_lea.vmem %s324, %s347
      %v927 = vld [vmem:[%s926] sm:$0xff]
      %v928 = vld [vmem:[%s926 + $0x8] sm:$0xff]
      %v929 = vld [vmem:[%s926 + $0x10] sm:$0xff]
      %v930 = vld [vmem:[%s926 + $0x18] sm:$0xff]
      %v931 = vld [vmem:[%s926 + $0x20] sm:$0xff]
      %v932 = vld [vmem:[%s926 + $0x28] sm:$0xff]
      %v933 = vld [vmem:[%s926 + $0x30] sm:$0xff]
      %v934 = vld [vmem:[%s926 + $0x38] sm:$0xff]
      %s935 = scalar_lea.vmem %s4, 16
      %v936 = vld [vmem:[%s935] sm:$0xf]
      %v938 = vsel %vm359, %v927, 0
      %v941 = vsel %vm359, %v928, 0
      %v944 = vsel %vm359, %v929, 0
      %v947 = vsel %vm359, %v930, 0
      %v950 = vsel %vm359, %v931, 0
      %v953 = vsel %vm359, %v932, 0
      %v956 = vsel %vm359, %v933, 0
      %v959 = vsel %vm359, %v934, 0
      %v962 = vsel %vm384, %v936, 0
      %964 = vmatprep.subr.mxu0 0.0
      %965 = vmatpush1.msra.mxu0 %v962
      %966 = vmatprep.subr.mxu0 0.0
      %967 = vmatpush1.msra.mxu0 0.0
      %968 = vmatprep.subr.mxu0 0.0
      %969 = vmatpush1.msra.mxu0 0.0
      %970 = vmatprep.subr.mxu0 0.0
      %971 = vmatpush1.msra.mxu0 0.0
      %972 = vmatprep.subr.mxu0 0.0
      %973 = vmatpush1.msra.mxu0 0.0
      %974 = vmatprep.subr.mxu0 0.0
      %975 = vmatpush1.msra.mxu0 0.0
      %976 = vmatprep.subr.mxu0 0.0
      %977 = vmatpush1.msra.mxu0 0.0
      %978 = vmatprep.subr.mxu0 0.0
      %979 = vmatpush1.msra.mxu0 0.0
      %980 = vmatprep.subr.mxu0 0.0
      %981 = vmatpush1.msra.mxu0 0.0
      %982 = vmatprep.subr.mxu0 0.0
      %983 = vmatpush1.msra.mxu0 0.0
      %984 = vmatprep.subr.mxu0 0.0
      %985 = vmatpush1.msra.mxu0 0.0
      %986 = vmatprep.subr.mxu0 0.0
      %987 = vmatpush1.msra.mxu0 0.0
      %988 = vmatprep.subr.mxu0 0.0
      %989 = vmatpush1.msra.mxu0 0.0
      %990 = vmatprep.subr.mxu0 0.0
      %991 = vmatpush1.msra.mxu0 0.0
      %992 = vmatprep.subr.mxu0 0.0
      %993 = vmatpush1.msra.mxu0 0.0
      %994 = vmatprep.subr.mxu0 0.0
      %995 = vmatpush1.msra.mxu0 0.0
      %996 = vmatprep.subr.mxu0 0.0
      %997 = vmatpush1.msra.mxu0 0.0
      %998 = vmatprep.subr.mxu0 0.0
      %999 = vmatpush1.msra.mxu0 0.0
      %1000 = vmatprep.subr.mxu0 0.0
      %1001 = vmatpush1.msra.mxu0 0.0
      %1002 = vmatprep.subr.mxu0 0.0
      %1003 = vmatpush1.msra.mxu0 0.0
      %1004 = vmatprep.subr.mxu0 0.0
      %1005 = vmatpush1.msra.mxu0 0.0
      %1006 = vmatprep.subr.mxu0 0.0
      %1007 = vmatpush1.msra.mxu0 0.0
      %1008 = vmatprep.subr.mxu0 0.0
      %1009 = vmatpush1.msra.mxu0 0.0
      %1010 = vmatprep.subr.mxu0 0.0
      %1011 = vmatpush1.msra.mxu0 0.0
      %1012 = vmatprep.subr.mxu0 0.0
      %1013 = vmatpush1.msra.mxu0 0.0
      %1014 = vmatprep.subr.mxu0 0.0
      %1015 = vmatpush1.msra.mxu0 0.0
      %1016 = vmatprep.subr.mxu0 0.0
      %1017 = vmatpush1.msra.mxu0 0.0
      %1018 = vmatprep.subr.mxu0 0.0
      %1019 = vmatpush1.msra.mxu0 0.0
      %1020 = vmatprep.subr.mxu0 0.0
      %1021 = vmatpush1.msra.mxu0 0.0
      %1022 = vmatprep.subr.mxu0 0.0
      %1023 = vmatpush1.msra.mxu0 0.0
      %1024 = vmatprep.subr.mxu0 0.0
      %1025 = vmatpush1.msra.mxu0 0.0
      %1026 = vmatprep.subr.mxu0 0.0
      %1027 = vmatpush1.msra.mxu0 0.0
      %1028 = vmatprep.mubr.f32.mxu0 0.0
      %1029 = vmatmul.mubr.f32.gmra.mrb[0].mxu0 %v938
      %v1030 = vpop.f32.mrb[0].mxu0
      %v1031 = vadd.f32 0.0, %v1030
      %v1032 = vpop.f32.mrb[0].mxu0
      %1033 = vmatprep.mubr.f32.mxu0 0.0
      %1034 = vmatmul.mubr.f32.gmra.mrb[0].mxu0 %v941
      %v1035 = vpop.f32.mrb[0].mxu0
      %v1036 = vadd.f32 0.0, %v1035
      %v1037 = vpop.f32.mrb[0].mxu0
      %1038 = vmatprep.mubr.f32.mxu0 0.0
      %1039 = vmatmul.mubr.f32.gmra.mrb[0].mxu0 %v944
      %v1040 = vpop.f32.mrb[0].mxu0
      %v1041 = vadd.f32 0.0, %v1040
      %v1042 = vpop.f32.mrb[0].mxu0
      %1043 = vmatprep.mubr.f32.mxu0 0.0
      %1044 = vmatmul.mubr.f32.gmra.mrb[0].mxu0 %v947
      %v1045 = vpop.f32.mrb[0].mxu0
      %v1046 = vadd.f32 0.0, %v1045
      %v1047 = vpop.f32.mrb[0].mxu0
      %1048 = vmatprep.mubr.f32.mxu0 0.0
      %1049 = vmatmul.mubr.f32.gmra.mrb[0].mxu0 %v950
      %v1050 = vpop.f32.mrb[0].mxu0
      %v1051 = vadd.f32 0.0, %v1050
      %v1052 = vpop.f32.mrb[0].mxu0
      %1053 = vmatprep.mubr.f32.mxu0 0.0
      %1054 = vmatmul.mubr.f32.gmra.mrb[0].mxu0 %v953
      %v1055 = vpop.f32.mrb[0].mxu0
      %v1056 = vadd.f32 0.0, %v1055
      %v1057 = vpop.f32.mrb[0].mxu0
      %1058 = vmatprep.mubr.f32.mxu0 0.0
      %1059 = vmatmul.mubr.f32.gmra.mrb[0].mxu0 %v956
      %v1060 = vpop.f32.mrb[0].mxu0
      %v1061 = vadd.f32 0.0, %v1060
      %v1062 = vpop.f32.mrb[0].mxu0
      %1063 = vmatprep.mubr.f32.mxu0 0.0
      %1064 = vmatmul.mubr.f32.gmra.mrb[0].mxu0 %v959
      %v1065 = vpop.f32.mrb[0].mxu0
      %v1066 = vadd.f32 0.0, %v1065
      %v1067 = vpop.f32.mrb[0].mxu0
      %1068 = vdwg.mxu0
      %v1069 = vadd.f32 %v918, %v1031
      %v1070 = vadd.f32 %v919, %v1036
      %v1071 = vadd.f32 %v920, %v1041
      %v1072 = vadd.f32 %v921, %v1046
      %v1073 = vadd.f32 %v922, %v1051
      %v1074 = vadd.f32 %v923, %v1056
      %v1075 = vadd.f32 %v924, %v1061
      %v1076 = vadd.f32 %v925, %v1066
      %v1077 = vld [vmem:[%s775 + $0x1] sm:$0xff]
      %v1078 = vld [vmem:[%s775 + $0x11] sm:$0xff]
      %v1079 = vld [vmem:[%s775 + $0x21] sm:$0xff]
      %v1080 = vld [vmem:[%s775 + $0x31] sm:$0xff]
      %v1081 = vld [vmem:[%s775 + $0x41] sm:$0xff]
      %v1082 = vld [vmem:[%s775 + $0x51] sm:$0xff]
      %v1083 = vld [vmem:[%s775 + $0x61] sm:$0xff]
      %v1084 = vld [vmem:[%s775 + $0x71] sm:$0xff]
      %s1085 = scalar_lea.vmem %s4, 20
      %v1086 = vld [vmem:[%s1085] sm:$0xf]
      %v1088 = vsel %vm359, %v1077, 0
      %v1091 = vsel %vm359, %v1078, 0
      %v1094 = vsel %vm359, %v1079, 0
      %v1097 = vsel %vm359, %v1080, 0
      %v1100 = vsel %vm359, %v1081, 0
      %v1103 = vsel %vm359, %v1082, 0
      %v1106 = vsel %vm359, %v1083, 0
      %v1109 = vsel %vm359, %v1084, 0
      %v1112 = vsel %vm384, %v1086, 0
      %1114 = vmatprep.subr.mxu0 0.0
      %1115 = vmatpush1.msra.mxu0 %v1112
      %1116 = vmatprep.subr.mxu0 0.0
      %1117 = vmatpush1.msra.mxu0 0.0
      %1118 = vmatprep.subr.mxu0 0.0
      %1119 = vmatpush1.msra.mxu0 0.0
      %1120 = vmatprep.subr.mxu0 0.0
      %1121 = vmatpush1.msra.mxu0 0.0
      %1122 = vmatprep.subr.mxu0 0.0
      %1123 = vmatpush1.msra.mxu0 0.0
      %1124 = vmatprep.subr.mxu0 0.0
      %1125 = vmatpush1.msra.mxu0 0.0
      %1126 = vmatprep.subr.mxu0 0.0
      %1127 = vmatpush1.msra.mxu0 0.0
      %1128 = vmatprep.subr.mxu0 0.0
      %1129 = vmatpush1.msra.mxu0 0.0
      %1130 = vmatprep.subr.mxu0 0.0
      %1131 = vmatpush1.msra.mxu0 0.0
      %1132 = vmatprep.subr.mxu0 0.0
      %1133 = vmatpush1.msra.mxu0 0.0
      %1134 = vmatprep.subr.mxu0 0.0
      %1135 = vmatpush1.msra.mxu0 0.0
      %1136 = vmatprep.subr.mxu0 0.0
      %1137 = vmatpush1.msra.mxu0 0.0
      %1138 = vmatprep.subr.mxu0 0.0
      %1139 = vmatpush1.msra.mxu0 0.0
      %1140 = vmatprep.subr.mxu0 0.0
      %1141 = vmatpush1.msra.mxu0 0.0
      %1142 = vmatprep.subr.mxu0 0.0
      %1143 = vmatpush1.msra.mxu0 0.0
      %1144 = vmatprep.subr.mxu0 0.0
      %1145 = vmatpush1.msra.mxu0 0.0
      %1146 = vmatprep.subr.mxu0 0.0
      %1147 = vmatpush1.msra.mxu0 0.0
      %1148 = vmatprep.subr.mxu0 0.0
      %1149 = vmatpush1.msra.mxu0 0.0
      %1150 = vmatprep.subr.mxu0 0.0
      %1151 = vmatpush1.msra.mxu0 0.0
      %1152 = vmatprep.subr.mxu0 0.0
      %1153 = vmatpush1.msra.mxu0 0.0
      %1154 = vmatprep.subr.mxu0 0.0
      %1155 = vmatpush1.msra.mxu0 0.0
      %1156 = vmatprep.subr.mxu0 0.0
      %1157 = vmatpush1.msra.mxu0 0.0
      %1158 = vmatprep.subr.mxu0 0.0
      %1159 = vmatpush1.msra.mxu0 0.0
      %1160 = vmatprep.subr.mxu0 0.0
      %1161 = vmatpush1.msra.mxu0 0.0
      %1162 = vmatprep.subr.mxu0 0.0
      %1163 = vmatpush1.msra.mxu0 0.0
      %1164 = vmatprep.subr.mxu0 0.0
      %1165 = vmatpush1.msra.mxu0 0.0
      %1166 = vmatprep.subr.mxu0 0.0
      %1167 = vmatpush1.msra.mxu0 0.0
      %1168 = vmatprep.subr.mxu0 0.0
      %1169 = vmatpush1.msra.mxu0 0.0
      %1170 = vmatprep.subr.mxu0 0.0
      %1171 = vmatpush1.msra.mxu0 0.0
      %1172 = vmatprep.subr.mxu0 0.0
      %1173 = vmatpush1.msra.mxu0 0.0
      %1174 = vmatprep.subr.mxu0 0.0
      %1175 = vmatpush1.msra.mxu0 0.0
      %1176 = vmatprep.subr.mxu0 0.0
      %1177 = vmatpush1.msra.mxu0 0.0
      %1178 = vmatprep.mubr.f32.mxu0 0.0
      %1179 = vmatmul.mubr.f32.gmra.mrb[0].mxu0 %v1088
      %v1180 = vpop.f32.mrb[0].mxu0
      %v1181 = vadd.f32 0.0, %v1180
      %v1182 = vpop.f32.mrb[0].mxu0
      %1183 = vmatprep.mubr.f32.mxu0 0.0
      %1184 = vmatmul.mubr.f32.gmra.mrb[0].mxu0 %v1091
      %v1185 = vpop.f32.mrb[0].mxu0
      %v1186 = vadd.f32 0.0, %v1185
      %v1187 = vpop.f32.mrb[0].mxu0
      %1188 = vmatprep.mubr.f32.mxu0 0.0
      %1189 = vmatmul.mubr.f32.gmra.mrb[0].mxu0 %v1094
      %v1190 = vpop.f32.mrb[0].mxu0
      %v1191 = vadd.f32 0.0, %v1190
      %v1192 = vpop.f32.mrb[0].mxu0
      %1193 = vmatprep.mubr.f32.mxu0 0.0
      %1194 = vmatmul.mubr.f32.gmra.mrb[0].mxu0 %v1097
      %v1195 = vpop.f32.mrb[0].mxu0
      %v1196 = vadd.f32 0.0, %v1195
      %v1197 = vpop.f32.mrb[0].mxu0
      %1198 = vmatprep.mubr.f32.mxu0 0.0
      %1199 = vmatmul.mubr.f32.gmra.mrb[0].mxu0 %v1100
      %v1200 = vpop.f32.mrb[0].mxu0
      %v1201 = vadd.f32 0.0, %v1200
      %v1202 = vpop.f32.mrb[0].mxu0
      %1203 = vmatprep.mubr.f32.mxu0 0.0
      %1204 = vmatmul.mubr.f32.gmra.mrb[0].mxu0 %v1103
      %v1205 = vpop.f32.mrb[0].mxu0
      %v1206 = vadd.f32 0.0, %v1205
      %v1207 = vpop.f32.mrb[0].mxu0
      %1208 = vmatprep.mubr.f32.mxu0 0.0
      %1209 = vmatmul.mubr.f32.gmra.mrb[0].mxu0 %v1106
      %v1210 = vpop.f32.mrb[0].mxu0
      %v1211 = vadd.f32 0.0, %v1210
      %v1212 = vpop.f32.mrb[0].mxu0
      %1213 = vmatprep.mubr.f32.mxu0 0.0
      %1214 = vmatmul.mubr.f32.gmra.mrb[0].mxu0 %v1109
      %v1215 = vpop.f32.mrb[0].mxu0
      %v1216 = vadd.f32 0.0, %v1215
      %v1217 = vpop.f32.mrb[0].mxu0
      %1218 = vdwg.mxu0
      %v1219 = vadd.f32 %v1069, %v1181
      %v1220 = vadd.f32 %v1070, %v1186
      %v1221 = vadd.f32 %v1071, %v1191
      %v1222 = vadd.f32 %v1072, %v1196
      %v1223 = vadd.f32 %v1073, %v1201
      %v1224 = vadd.f32 %v1074, %v1206
      %v1225 = vadd.f32 %v1075, %v1211
      %v1226 = vadd.f32 %v1076, %v1216
      %s1227 = sadd.s32 %s335, 1
      %s1228 = smul.u32 %s1227, 16
      %s1229 = scalar_lea.vmem %s309, %s1228
      %v1230 = vld [vmem:[%s1229] sm:$0xff]
      %v1231 = vld [vmem:[%s1229 + $0x10] sm:$0xff]
      %v1232 = vld [vmem:[%s1229 + $0x20] sm:$0xff]
      %v1233 = vld [vmem:[%s1229 + $0x30] sm:$0xff]
      %v1234 = vld [vmem:[%s1229 + $0x40] sm:$0xff]
      %v1235 = vld [vmem:[%s1229 + $0x50] sm:$0xff]
      %v1236 = vld [vmem:[%s1229 + $0x60] sm:$0xff]
      %v1237 = vld [vmem:[%s1229 + $0x70] sm:$0xff]
      %s1238 = scalar_lea.vmem %s4, 24
      %v1239 = vld [vmem:[%s1238] sm:$0xf]
      %v1241 = vsel %vm359, %v1230, 0
      %v1244 = vsel %vm359, %v1231, 0
      %v1247 = vsel %vm359, %v1232, 0
      %v1250 = vsel %vm359, %v1233, 0
      %v1253 = vsel %vm359, %v1234, 0
      %v1256 = vsel %vm359, %v1235, 0
      %v1259 = vsel %vm359, %v1236, 0
      %v1262 = vsel %vm359, %v1237, 0
      %v1265 = vsel %vm384, %v1239, 0
      %1267 = vmatprep.subr.mxu0 0.0
      %1268 = vmatpush1.msra.mxu0 %v1265
      %1269 = vmatprep.subr.mxu0 0.0
      %1270 = vmatpush1.msra.mxu0 0.0
      %1271 = vmatprep.subr.mxu0 0.0
      %1272 = vmatpush1.msra.mxu0 0.0
      %1273 = vmatprep.subr.mxu0 0.0
      %1274 = vmatpush1.msra.mxu0 0.0
      %1275 = vmatprep.subr.mxu0 0.0
      %1276 = vmatpush1.msra.mxu0 0.0
      %1277 = vmatprep.subr.mxu0 0.0
      %1278 = vmatpush1.msra.mxu0 0.0
      %1279 = vmatprep.subr.mxu0 0.0
      %1280 = vmatpush1.msra.mxu0 0.0
      %1281 = vmatprep.subr.mxu0 0.0
      %1282 = vmatpush1.msra.mxu0 0.0
      %1283 = vmatprep.subr.mxu0 0.0
      %1284 = vmatpush1.msra.mxu0 0.0
      %1285 = vmatprep.subr.mxu0 0.0
      %1286 = vmatpush1.msra.mxu0 0.0
      %1287 = vmatprep.subr.mxu0 0.0
      %1288 = vmatpush1.msra.mxu0 0.0
      %1289 = vmatprep.subr.mxu0 0.0
      %1290 = vmatpush1.msra.mxu0 0.0
      %1291 = vmatprep.subr.mxu0 0.0
      %1292 = vmatpush1.msra.mxu0 0.0
      %1293 = vmatprep.subr.mxu0 0.0
      %1294 = vmatpush1.msra.mxu0 0.0
      %1295 = vmatprep.subr.mxu0 0.0
      %1296 = vmatpush1.msra.mxu0 0.0
      %1297 = vmatprep.subr.mxu0 0.0
      %1298 = vmatpush1.msra.mxu0 0.0
      %1299 = vmatprep.subr.mxu0 0.0
      %1300 = vmatpush1.msra.mxu0 0.0
      %1301 = vmatprep.subr.mxu0 0.0
      %1302 = vmatpush1.msra.mxu0 0.0
      %1303 = vmatprep.subr.mxu0 0.0
      %1304 = vmatpush1.msra.mxu0 0.0
      %1305 = vmatprep.subr.mxu0 0.0
      %1306 = vmatpush1.msra.mxu0 0.0
      %1307 = vmatprep.subr.mxu0 0.0
      %1308 = vmatpush1.msra.mxu0 0.0
      %1309 = vmatprep.subr.mxu0 0.0
      %1310 = vmatpush1.msra.mxu0 0.0
      %1311 = vmatprep.subr.mxu0 0.0
      %1312 = vmatpush1.msra.mxu0 0.0
      %1313 = vmatprep.subr.mxu0 0.0
      %1314 = vmatpush1.msra.mxu0 0.0
      %1315 = vmatprep.subr.mxu0 0.0
      %1316 = vmatpush1.msra.mxu0 0.0
      %1317 = vmatprep.subr.mxu0 0.0
      %1318 = vmatpush1.msra.mxu0 0.0
      %1319 = vmatprep.subr.mxu0 0.0
      %1320 = vmatpush1.msra.mxu0 0.0
      %1321 = vmatprep.subr.mxu0 0.0
      %1322 = vmatpush1.msra.mxu0 0.0
      %1323 = vmatprep.subr.mxu0 0.0
      %1324 = vmatpush1.msra.mxu0 0.0
      %1325 = vmatprep.subr.mxu0 0.0
      %1326 = vmatpush1.msra.mxu0 0.0
      %1327 = vmatprep.subr.mxu0 0.0
      %1328 = vmatpush1.msra.mxu0 0.0
      %1329 = vmatprep.subr.mxu0 0.0
      %1330 = vmatpush1.msra.mxu0 0.0
      %1331 = vmatprep.mubr.f32.mxu0 0.0
      %1332 = vmatmul.mubr.f32.gmra.mrb[0].mxu0 %v1241
      %v1333 = vpop.f32.mrb[0].mxu0
      %v1334 = vadd.f32 0.0, %v1333
      %v1335 = vpop.f32.mrb[0].mxu0
      %1336 = vmatprep.mubr.f32.mxu0 0.0
      %1337 = vmatmul.mubr.f32.gmra.mrb[0].mxu0 %v1244
      %v1338 = vpop.f32.mrb[0].mxu0
      %v1339 = vadd.f32 0.0, %v1338
      %v1340 = vpop.f32.mrb[0].mxu0
      %1341 = vmatprep.mubr.f32.mxu0 0.0
      %1342 = vmatmul.mubr.f32.gmra.mrb[0].mxu0 %v1247
      %v1343 = vpop.f32.mrb[0].mxu0
      %v1344 = vadd.f32 0.0, %v1343
      %v1345 = vpop.f32.mrb[0].mxu0
      %1346 = vmatprep.mubr.f32.mxu0 0.0
      %1347 = vmatmul.mubr.f32.gmra.mrb[0].mxu0 %v1250
      %v1348 = vpop.f32.mrb[0].mxu0
      %v1349 = vadd.f32 0.0, %v1348
      %v1350 = vpop.f32.mrb[0].mxu0
      %1351 = vmatprep.mubr.f32.mxu0 0.0
      %1352 = vmatmul.mubr.f32.gmra.mrb[0].mxu0 %v1253
      %v1353 = vpop.f32.mrb[0].mxu0
      %v1354 = vadd.f32 0.0, %v1353
      %v1355 = vpop.f32.mrb[0].mxu0
      %1356 = vmatprep.mubr.f32.mxu0 0.0
      %1357 = vmatmul.mubr.f32.gmra.mrb[0].mxu0 %v1256
      %v1358 = vpop.f32.mrb[0].mxu0
      %v1359 = vadd.f32 0.0, %v1358
      %v1360 = vpop.f32.mrb[0].mxu0
      %1361 = vmatprep.mubr.f32.mxu0 0.0
      %1362 = vmatmul.mubr.f32.gmra.mrb[0].mxu0 %v1259
      %v1363 = vpop.f32.mrb[0].mxu0
      %v1364 = vadd.f32 0.0, %v1363
      %v1365 = vpop.f32.mrb[0].mxu0
      %1366 = vmatprep.mubr.f32.mxu0 0.0
      %1367 = vmatmul.mubr.f32.gmra.mrb[0].mxu0 %v1262
      %v1368 = vpop.f32.mrb[0].mxu0
      %v1369 = vadd.f32 0.0, %v1368
      %v1370 = vpop.f32.mrb[0].mxu0
      %1371 = vdwg.mxu0
      %v1372 = vadd.f32 %v1219, %v1334
      %v1373 = vadd.f32 %v1220, %v1339
      %v1374 = vadd.f32 %v1221, %v1344
      %v1375 = vadd.f32 %v1222, %v1349
      %v1376 = vadd.f32 %v1223, %v1354
      %v1377 = vadd.f32 %v1224, %v1359
      %v1378 = vadd.f32 %v1225, %v1364
      %v1379 = vadd.f32 %v1226, %v1369
      %s1380 = smul.u32 %s1227, 8
      %s1381 = scalar_lea.vmem %s314, %s1380
      %v1382 = vld [vmem:[%s1381] sm:$0xff]
      %v1383 = vld [vmem:[%s1381 + $0x8] sm:$0xff]
      %v1384 = vld [vmem:[%s1381 + $0x10] sm:$0xff]
      %v1385 = vld [vmem:[%s1381 + $0x18] sm:$0xff]
      %v1386 = vld [vmem:[%s1381 + $0x20] sm:$0xff]
      %v1387 = vld [vmem:[%s1381 + $0x28] sm:$0xff]
      %v1388 = vld [vmem:[%s1381 + $0x30] sm:$0xff]
      %v1389 = vld [vmem:[%s1381 + $0x38] sm:$0xff]
      %s1390 = scalar_lea.vmem %s4, 28
      %v1391 = vld [vmem:[%s1390] sm:$0xf]
      %v1393 = vsel %vm359, %v1382, 0
      %v1396 = vsel %vm359, %v1383, 0
      %v1399 = vsel %vm359, %v1384, 0
      %v1402 = vsel %vm359, %v1385, 0
      %v1405 = vsel %vm359, %v1386, 0
      %v1408 = vsel %vm359, %v1387, 0
      %v1411 = vsel %vm359, %v1388, 0
      %v1414 = vsel %vm359, %v1389, 0
      %v1417 = vsel %vm384, %v1391, 0
      %1419 = vmatprep.subr.mxu0 0.0
      %1420 = vmatpush1.msra.mxu0 %v1417
      %1421 = vmatprep.subr.mxu0 0.0
      %1422 = vmatpush1.msra.mxu0 0.0
      %1423 = vmatprep.subr.mxu0 0.0
      %1424 = vmatpush1.msra.mxu0 0.0
      %1425 = vmatprep.subr.mxu0 0.0
      %1426 = vmatpush1.msra.mxu0 0.0
      %1427 = vmatprep.subr.mxu0 0.0
      %1428 = vmatpush1.msra.mxu0 0.0
      %1429 = vmatprep.subr.mxu0 0.0
      %1430 = vmatpush1.msra.mxu0 0.0
      %1431 = vmatprep.subr.mxu0 0.0
      %1432 = vmatpush1.msra.mxu0 0.0
      %1433 = vmatprep.subr.mxu0 0.0
      %1434 = vmatpush1.msra.mxu0 0.0
      %1435 = vmatprep.subr.mxu0 0.0
      %1436 = vmatpush1.msra.mxu0 0.0
      %1437 = vmatprep.subr.mxu0 0.0
      %1438 = vmatpush1.msra.mxu0 0.0
      %1439 = vmatprep.subr.mxu0 0.0
      %1440 = vmatpush1.msra.mxu0 0.0
      %1441 = vmatprep.subr.mxu0 0.0
      %1442 = vmatpush1.msra.mxu0 0.0
      %1443 = vmatprep.subr.mxu0 0.0
      %1444 = vmatpush1.msra.mxu0 0.0
      %1445 = vmatprep.subr.mxu0 0.0
      %1446 = vmatpush1.msra.mxu0 0.0
      %1447 = vmatprep.subr.mxu0 0.0
      %1448 = vmatpush1.msra.mxu0 0.0
      %1449 = vmatprep.subr.mxu0 0.0
      %1450 = vmatpush1.msra.mxu0 0.0
      %1451 = vmatprep.subr.mxu0 0.0
      %1452 = vmatpush1.msra.mxu0 0.0
      %1453 = vmatprep.subr.mxu0 0.0
      %1454 = vmatpush1.msra.mxu0 0.0
      %1455 = vmatprep.subr.mxu0 0.0
      %1456 = vmatpush1.msra.mxu0 0.0
      %1457 = vmatprep.subr.mxu0 0.0
      %1458 = vmatpush1.msra.mxu0 0.0
      %1459 = vmatprep.subr.mxu0 0.0
      %1460 = vmatpush1.msra.mxu0 0.0
      %1461 = vmatprep.subr.mxu0 0.0
      %1462 = vmatpush1.msra.mxu0 0.0
      %1463 = vmatprep.subr.mxu0 0.0
      %1464 = vmatpush1.msra.mxu0 0.0
      %1465 = vmatprep.subr.mxu0 0.0
      %1466 = vmatpush1.msra.mxu0 0.0
      %1467 = vmatprep.subr.mxu0 0.0
      %1468 = vmatpush1.msra.mxu0 0.0
      %1469 = vmatprep.subr.mxu0 0.0
      %1470 = vmatpush1.msra.mxu0 0.0
      %1471 = vmatprep.subr.mxu0 0.0
      %1472 = vmatpush1.msra.mxu0 0.0
      %1473 = vmatprep.subr.mxu0 0.0
      %1474 = vmatpush1.msra.mxu0 0.0
      %1475 = vmatprep.subr.mxu0 0.0
      %1476 = vmatpush1.msra.mxu0 0.0
      %1477 = vmatprep.subr.mxu0 0.0
      %1478 = vmatpush1.msra.mxu0 0.0
      %1479 = vmatprep.subr.mxu0 0.0
      %1480 = vmatpush1.msra.mxu0 0.0
      %1481 = vmatprep.subr.mxu0 0.0
      %1482 = vmatpush1.msra.mxu0 0.0
      %1483 = vmatprep.mubr.f32.mxu0 0.0
      %1484 = vmatmul.mubr.f32.gmra.mrb[0].mxu0 %v1393
      %v1485 = vpop.f32.mrb[0].mxu0
      %v1486 = vadd.f32 0.0, %v1485
      %v1487 = vpop.f32.mrb[0].mxu0
      %1488 = vmatprep.mubr.f32.mxu0 0.0
      %1489 = vmatmul.mubr.f32.gmra.mrb[0].mxu0 %v1396
      %v1490 = vpop.f32.mrb[0].mxu0
      %v1491 = vadd.f32 0.0, %v1490
      %v1492 = vpop.f32.mrb[0].mxu0
      %1493 = vmatprep.mubr.f32.mxu0 0.0
      %1494 = vmatmul.mubr.f32.gmra.mrb[0].mxu0 %v1399
      %v1495 = vpop.f32.mrb[0].mxu0
      %v1496 = vadd.f32 0.0, %v1495
      %v1497 = vpop.f32.mrb[0].mxu0
      %1498 = vmatprep.mubr.f32.mxu0 0.0
      %1499 = vmatmul.mubr.f32.gmra.mrb[0].mxu0 %v1402
      %v1500 = vpop.f32.mrb[0].mxu0
      %v1501 = vadd.f32 0.0, %v1500
      %v1502 = vpop.f32.mrb[0].mxu0
      %1503 = vmatprep.mubr.f32.mxu0 0.0
      %1504 = vmatmul.mubr.f32.gmra.mrb[0].mxu0 %v1405
      %v1505 = vpop.f32.mrb[0].mxu0
      %v1506 = vadd.f32 0.0, %v1505
      %v1507 = vpop.f32.mrb[0].mxu0
      %1508 = vmatprep.mubr.f32.mxu0 0.0
      %1509 = vmatmul.mubr.f32.gmra.mrb[0].mxu0 %v1408
      %v1510 = vpop.f32.mrb[0].mxu0
      %v1511 = vadd.f32 0.0, %v1510
      %v1512 = vpop.f32.mrb[0].mxu0
      %1513 = vmatprep.mubr.f32.mxu0 0.0
      %1514 = vmatmul.mubr.f32.gmra.mrb[0].mxu0 %v1411
      %v1515 = vpop.f32.mrb[0].mxu0
      %v1516 = vadd.f32 0.0, %v1515
      %v1517 = vpop.f32.mrb[0].mxu0
      %1518 = vmatprep.mubr.f32.mxu0 0.0
      %1519 = vmatmul.mubr.f32.gmra.mrb[0].mxu0 %v1414
      %v1520 = vpop.f32.mrb[0].mxu0
      %v1521 = vadd.f32 0.0, %v1520
      %v1522 = vpop.f32.mrb[0].mxu0
      %1523 = vdwg.mxu0
      %v1524 = vadd.f32 %v1372, %v1486
      %v1525 = vadd.f32 %v1373, %v1491
      %v1526 = vadd.f32 %v1374, %v1496
      %v1527 = vadd.f32 %v1375, %v1501
      %v1528 = vadd.f32 %v1376, %v1506
      %v1529 = vadd.f32 %v1377, %v1511
      %v1530 = vadd.f32 %v1378, %v1516
      %v1531 = vadd.f32 %v1379, %v1521
      %v1532 = vld [vmem:[%s1229 + $0x1] sm:$0xff]
      %v1533 = vld [vmem:[%s1229 + $0x11] sm:$0xff]
      %v1534 = vld [vmem:[%s1229 + $0x21] sm:$0xff]
      %v1535 = vld [vmem:[%s1229 + $0x31] sm:$0xff]
      %v1536 = vld [vmem:[%s1229 + $0x41] sm:$0xff]
      %v1537 = vld [vmem:[%s1229 + $0x51] sm:$0xff]
      %v1538 = vld [vmem:[%s1229 + $0x61] sm:$0xff]
      %v1539 = vld [vmem:[%s1229 + $0x71] sm:$0xff]
      %s1540 = scalar_lea.vmem %s4, 32
      %v1541 = vld [vmem:[%s1540] sm:$0xf]
      %v1543 = vsel %vm359, %v1532, 0
      %v1546 = vsel %vm359, %v1533, 0
      %v1549 = vsel %vm359, %v1534, 0
      %v1552 = vsel %vm359, %v1535, 0
      %v1555 = vsel %vm359, %v1536, 0
      %v1558 = vsel %vm359, %v1537, 0
      %v1561 = vsel %vm359, %v1538, 0
      %v1564 = vsel %vm359, %v1539, 0
      %v1567 = vsel %vm384, %v1541, 0
      %1569 = vmatprep.subr.mxu0 0.0
      %1570 = vmatpush1.msra.mxu0 %v1567
      %1571 = vmatprep.subr.mxu0 0.0
      %1572 = vmatpush1.msra.mxu0 0.0
      %1573 = vmatprep.subr.mxu0 0.0
      %1574 = vmatpush1.msra.mxu0 0.0
      %1575 = vmatprep.subr.mxu0 0.0
      %1576 = vmatpush1.msra.mxu0 0.0
      %1577 = vmatprep.subr.mxu0 0.0
      %1578 = vmatpush1.msra.mxu0 0.0
      %1579 = vmatprep.subr.mxu0 0.0
      %1580 = vmatpush1.msra.mxu0 0.0
      %1581 = vmatprep.subr.mxu0 0.0
      %1582 = vmatpush1.msra.mxu0 0.0
      %1583 = vmatprep.subr.mxu0 0.0
      %1584 = vmatpush1.msra.mxu0 0.0
      %1585 = vmatprep.subr.mxu0 0.0
      %1586 = vmatpush1.msra.mxu0 0.0
      %1587 = vmatprep.subr.mxu0 0.0
      %1588 = vmatpush1.msra.mxu0 0.0
      %1589 = vmatprep.subr.mxu0 0.0
      %1590 = vmatpush1.msra.mxu0 0.0
      %1591 = vmatprep.subr.mxu0 0.0
      %1592 = vmatpush1.msra.mxu0 0.0
      %1593 = vmatprep.subr.mxu0 0.0
      %1594 = vmatpush1.msra.mxu0 0.0
      %1595 = vmatprep.subr.mxu0 0.0
      %1596 = vmatpush1.msra.mxu0 0.0
      %1597 = vmatprep.subr.mxu0 0.0
      %1598 = vmatpush1.msra.mxu0 0.0
      %1599 = vmatprep.subr.mxu0 0.0
      %1600 = vmatpush1.msra.mxu0 0.0
      %1601 = vmatprep.subr.mxu0 0.0
      %1602 = vmatpush1.msra.mxu0 0.0
      %1603 = vmatprep.subr.mxu0 0.0
      %1604 = vmatpush1.msra.mxu0 0.0
      %1605 = vmatprep.subr.mxu0 0.0
      %1606 = vmatpush1.msra.mxu0 0.0
      %1607 = vmatprep.subr.mxu0 0.0
      %1608 = vmatpush1.msra.mxu0 0.0
      %1609 = vmatprep.subr.mxu0 0.0
      %1610 = vmatpush1.msra.mxu0 0.0
      %1611 = vmatprep.subr.mxu0 0.0
      %1612 = vmatpush1.msra.mxu0 0.0
      %1613 = vmatprep.subr.mxu0 0.0
      %1614 = vmatpush1.msra.mxu0 0.0
      %1615 = vmatprep.subr.mxu0 0.0
      %1616 = vmatpush1.msra.mxu0 0.0
      %1617 = vmatprep.subr.mxu0 0.0
      %1618 = vmatpush1.msra.mxu0 0.0
      %1619 = vmatprep.subr.mxu0 0.0
      %1620 = vmatpush1.msra.mxu0 0.0
      %1621 = vmatprep.subr.mxu0 0.0
      %1622 = vmatpush1.msra.mxu0 0.0
      %1623 = vmatprep.subr.mxu0 0.0
      %1624 = vmatpush1.msra.mxu0 0.0
      %1625 = vmatprep.subr.mxu0 0.0
      %1626 = vmatpush1.msra.mxu0 0.0
      %1627 = vmatprep.subr.mxu0 0.0
      %1628 = vmatpush1.msra.mxu0 0.0
      %1629 = vmatprep.subr.mxu0 0.0
      %1630 = vmatpush1.msra.mxu0 0.0
      %1631 = vmatprep.subr.mxu0 0.0
      %1632 = vmatpush1.msra.mxu0 0.0
      %1633 = vmatprep.mubr.f32.mxu0 0.0
      %1634 = vmatmul.mubr.f32.gmra.mrb[0].mxu0 %v1543
      %v1635 = vpop.f32.mrb[0].mxu0
      %v1636 = vadd.f32 0.0, %v1635
      %v1637 = vpop.f32.mrb[0].mxu0
      %1638 = vmatprep.mubr.f32.mxu0 0.0
      %1639 = vmatmul.mubr.f32.gmra.mrb[0].mxu0 %v1546
      %v1640 = vpop.f32.mrb[0].mxu0
      %v1641 = vadd.f32 0.0, %v1640
      %v1642 = vpop.f32.mrb[0].mxu0
      %1643 = vmatprep.mubr.f32.mxu0 0.0
      %1644 = vmatmul.mubr.f32.gmra.mrb[0].mxu0 %v1549
      %v1645 = vpop.f32.mrb[0].mxu0
      %v1646 = vadd.f32 0.0, %v1645
      %v1647 = vpop.f32.mrb[0].mxu0
      %1648 = vmatprep.mubr.f32.mxu0 0.0
      %1649 = vmatmul.mubr.f32.gmra.mrb[0].mxu0 %v1552
      %v1650 = vpop.f32.mrb[0].mxu0
      %v1651 = vadd.f32 0.0, %v1650
      %v1652 = vpop.f32.mrb[0].mxu0
      %1653 = vmatprep.mubr.f32.mxu0 0.0
      %1654 = vmatmul.mubr.f32.gmra.mrb[0].mxu0 %v1555
      %v1655 = vpop.f32.mrb[0].mxu0
      %v1656 = vadd.f32 0.0, %v1655
      %v1657 = vpop.f32.mrb[0].mxu0
      %1658 = vmatprep.mubr.f32.mxu0 0.0
      %1659 = vmatmul.mubr.f32.gmra.mrb[0].mxu0 %v1558
      %v1660 = vpop.f32.mrb[0].mxu0
      %v1661 = vadd.f32 0.0, %v1660
      %v1662 = vpop.f32.mrb[0].mxu0
      %1663 = vmatprep.mubr.f32.mxu0 0.0
      %1664 = vmatmul.mubr.f32.gmra.mrb[0].mxu0 %v1561
      %v1665 = vpop.f32.mrb[0].mxu0
      %v1666 = vadd.f32 0.0, %v1665
      %v1667 = vpop.f32.mrb[0].mxu0
      %1668 = vmatprep.mubr.f32.mxu0 0.0
      %1669 = vmatmul.mubr.f32.gmra.mrb[0].mxu0 %v1564
      %v1670 = vpop.f32.mrb[0].mxu0
      %v1671 = vadd.f32 0.0, %v1670
      %v1672 = vpop.f32.mrb[0].mxu0
      %1673 = vdwg.mxu0
      %v1674 = vadd.f32 %v1524, %v1636
      %v1675 = vadd.f32 %v1525, %v1641
      %v1676 = vadd.f32 %v1526, %v1646
      %v1677 = vadd.f32 %v1527, %v1651
      %v1678 = vadd.f32 %v1528, %v1656
      %v1679 = vadd.f32 %v1529, %v1661
      %v1680 = vadd.f32 %v1530, %v1666
      %v1681 = vadd.f32 %v1531, %v1671
      %v1682 = vld [vmem:[%s5] sm:$0x1]
      %v1684 = vlaneseq
      %v1685 = vshrl.u32 %v1684, 7
      %v1686 = vsub.s32 0, %v1685
      %v1687 = vrot.slane %v1682, %v1686
      %v1689 = vadd.f32 %v1674, %v1687
      %v1690 = vadd.f32 %v1675, %v1687
      %v1691 = vadd.f32 %v1676, %v1687
      %v1692 = vadd.f32 %v1677, %v1687
      %v1693 = vadd.f32 %v1678, %v1687
      %v1694 = vadd.f32 %v1679, %v1687
      %v1695 = vadd.f32 %v1680, %v1687
      %v1696 = vadd.f32 %v1681, %v1687
      %vm1697 = vcmask 64512
      %1698 = vst.msk [vmem:[%s333] sm:$0xff] %vm1697, %v1689
      %1699 = vst.msk [vmem:[%s333 + $0x8] sm:$0xff] %vm1697, %v1690
      %1700 = vst.msk [vmem:[%s333 + $0x10] sm:$0xff] %vm1697, %v1691
      %1701 = vst.msk [vmem:[%s333 + $0x18] sm:$0xff] %vm1697, %v1692
      %1702 = vst.msk [vmem:[%s333 + $0x20] sm:$0xff] %vm1697, %v1693
      %1703 = vst.msk [vmem:[%s333 + $0x28] sm:$0xff] %vm1697, %v1694
      %1704 = vst.msk [vmem:[%s333 + $0x30] sm:$0xff] %vm1697, %v1695
      %1705 = vst.msk [vmem:[%s333 + $0x38] sm:$0xff] %vm1697, %v1696
      %s1706 = smul.u32 8, %s22
      %p1707 = scmp.lt.s32.totalorder %s21, 1
      %s1708 = scalar_select %p1707, %s21, 1
      %p1709 = scmp.lt.s32.totalorder %s1706, 7
      %s1710 = scalar_select %p1709, %s1706, 7
      %s1711 = smul.addr %s1708, 8
      %s1712 = sadd.s32 %s1710, %s1711
      %s1713 = smul.addr %s1712, 8
      %s1714 = scalar_lea.vmem %s6, %s1713
      // Predicated region
      $region45: #{downsample_conv.1} parent=43 // pred_check
        %p1715 = pneg %p195
      $region46: #{downsample_conv.1} parent=43 // pred_check_branch
        %1717 = sbr.rel (%p1715) target = $region48
      $region47: #{downsample_conv.1} parent=43 // pred_region
        %s1718 = smul.u32 8, %s22
      $region48: #{downsample_conv.1} parent=43 // pred_fallthru
        _
    $region44: #{downsample_conv.1} parent=5 // pred_fallthru
      _
    %p1719 = scmp.le.s32.totalorder 2, %s12
    // Predicated region
    $region49: #{downsample_conv.1} parent=5 // pred_check
      %p1720 = pneg %p1719
    $region50: #{downsample_conv.1} parent=5 // pred_check_branch
      %1722 = sbr.rel (%p1720) target = $region52
    $region51: #{downsample_conv.1} parent=5 // pred_region
      %s1723 = ssub.s32 %s12, 2
      // Predicated region
      $region53: #{downsample_conv.1} parent=51 // pred_check
        %p1724 = pneg %p201
      $region54: #{downsample_conv.1} parent=51 // pred_check_branch
        %1726 = sbr.rel (%p1724) target = $region56
      $region55: #{downsample_conv.1} parent=51 // pred_region
        %s1727 = smul.u32 8, %s24
        %p1728 = scmp.lt.s32.totalorder %s23, 1
        %s1729 = scalar_select %p1728, %s23, 1
        %p1730 = scmp.lt.s32.totalorder %s1727, 7
        %s1731 = scalar_select %p1730, %s1727, 7
        %s1732 = smul.addr %s1729, 8
        %s1733 = sadd.s32 %s1731, %s1732
        %s1734 = smul.addr %s1733, 8
        %s1735 = scalar_lea.vmem %s6, %s1734
      $region56: #{downsample_conv.1} parent=51 // pred_fallthru
        _
    $region52: #{downsample_conv.1} parent=5 // pred_fallthru
      _
  $region6: #{downsample_conv.1} parent=0 // loop_footer
    %s16 = sadd.s32 1, %s12
  $region7: #{downsample_conv.1} parent=0 // loop_footer_branch
    %11 = sbr.rel target = $region3
  $region8: #{downsample_conv.1} parent=0 // loop_exit
    _

</llo_original>
